<compile_context>
chip_gen: v5e
topology: v5e:2x2
jax: 0.10.0
libtpu: 0.0.40
codegen_flags: <defaults>
</compile_context>

<pallas_src>
import functools

import jax
import jax.numpy as jnp
from jax import lax
from jax.experimental import pallas as pl
from jax.experimental.pallas import tpu as pltpu


def _msconv_kernel(x_ref, w_ref, b_ref, o_ref, *, H, W, Cin, Cout):
    # x_ref: (1, Cin, L)      L = (H+4)*W + 4   (row-padded, flat, guard zeros)
    # w_ref: (25, Cout, Cin)  packed tap weights, BN scale pre-folded
    # b_ref: (Cout, 1)        fused bias = conv_bias*scale + beta - mean*scale
    # o_ref: (1, Cout, H*W)   lane-dense output (already NCHW order)
    HW = H * W
    x = x_ref[0]                                            # (Cin, L)
    ox = lax.broadcasted_iota(jnp.int32, (Cin, HW), 1) % W  # output column idx

    acc = jnp.zeros((Cout, HW), jnp.float32)
    for dy in range(5):
        for dx in range(5):
            off = dy * W + dx
            xt = x[:, off:off + HW]                         # (Cin, HW) slice
            # Horizontal "same" padding: zero columns that wrapped to the
            # neighbouring row.  dx == 2 needs no mask.
            if dx < 2:
                xt = jnp.where(ox >= (2 - dx), xt, 0.0)
            elif dx > 2:
                xt = jnp.where(ox < (W + 2 - dx), xt, 0.0)
            wt = w_ref[dy * 5 + dx]                         # (Cout, Cin)
            acc = acc + jnp.dot(wt, xt, preferred_element_type=jnp.float32)

    y = acc + b_ref[...]                                    # fused bias
    o_ref[0] = jnp.maximum(y, 0.0).astype(o_ref.dtype)      # ReLU


def multi_scale_conv(x_nchw, p, eps=1e-5):
    """x_nchw: (B, Cin, H, W) f32.  p: dict of torch-layout weights/BN params."""
    B, Cin, H, W = x_nchw.shape
    Cout4 = p["w1"].shape[0]
    Cout = 4 * Cout4

    # ---- pack the four conv kernels into one (5, 5, Cout, Cin) tap tensor ---
    w_all = jnp.zeros((5, 5, Cout, Cin), jnp.float32)
    # 1x1 (pad 0) -> center tap
    w_all = w_all.at[2, 2, 0:Cout4, :].set(p["w1"][:, :, 0, 0])
    # 3x3 (pad 1) -> inner 3x3 taps
    for ky in range(3):
        for kx in range(3):
            w_all = w_all.at[ky + 1, kx + 1, Cout4:2 * Cout4, :].set(
                p["w3"][:, :, ky, kx])
    # 5x5 (pad 2) -> all taps
    for ky in range(5):
        for kx in range(5):
            w_all = w_all.at[ky, kx, 2 * Cout4:3 * Cout4, :].set(
                p["w5"][:, :, ky, kx])
    # 3x3 dilation 2 (pad 2) -> even taps
    for ky in range(3):
        for kx in range(3):
            w_all = w_all.at[2 * ky, 2 * kx, 3 * Cout4:4 * Cout4, :].set(
                p["wd"][:, :, ky, kx])

    # ---- fold conv bias + BatchNorm (eval mode) into weights / single bias --
    scale = p["gamma"] / jnp.sqrt(p["var"] + eps)                    # (Cout,)
    bias = jnp.concatenate([p["b1"], p["b3"], p["b5"], p["bd"]])     # (Cout,)
    fused_bias = bias * scale + (p["beta"] - p["mean"] * scale)      # (Cout,)

    w_packed = (w_all * scale[None, None, :, None]).reshape(25, Cout, Cin)
    fused_bias = fused_bias.reshape(Cout, 1)

    # ---- layout prep: row-padded, flattened, 2 guard zeros on each end ------
    xv = jnp.pad(x_nchw, ((0, 0), (0, 0), (2, 2), (0, 0)))   # (B, Cin, H+4, W)
    xf = xv.reshape(B, Cin, (H + 4) * W)                     # contiguous merge
    xf = jnp.pad(xf, ((0, 0), (0, 0), (2, 2)))               # (B, Cin, L)
    L = (H + 4) * W + 4

    kernel = functools.partial(_msconv_kernel, H=H, W=W, Cin=Cin, Cout=Cout)

    out = pl.pallas_call(
        kernel,
        out_shape=jax.ShapeDtypeStruct((B, Cout, H * W), x_nchw.dtype),
        grid_spec=pltpu.PrefetchScalarGridSpec(
            num_scalar_prefetch=0,
            grid=(B,),
            in_specs=[
                pl.BlockSpec((1, Cin, L), lambda b: (b, 0, 0)),
                pl.BlockSpec((25, Cout, Cin), lambda b: (0, 0, 0)),
                pl.BlockSpec((Cout, 1), lambda b: (0, 0)),
            ],
            out_specs=pl.BlockSpec((1, Cout, H * W), lambda b: (b, 0, 0)),
        ),
        compiler_params=pltpu.CompilerParams(
            dimension_semantics=("parallel",),
            vmem_limit_bytes=64 * 1024 * 1024,
        ),
    )(xf, w_packed, fused_bias)

    return out.reshape(B, Cout, H, W)


def _reference(x, p, eps=1e-5):
    # Plain-JAX reference mirroring the PyTorch forward (eval-mode BN).
    def conv(x, w, b, pad, dil=1):
        y = jax.lax.conv_general_dilated(
            x, w, window_strides=(1, 1),
            padding=((pad, pad), (pad, pad)),
            rhs_dilation=(dil, dil),
            dimension_numbers=("NCHW", "OIHW", "NCHW"))
        return y + b[None, :, None, None]

    y = jnp.concatenate([
        conv(x, p["w1"], p["b1"], 0),
        conv(x, p["w3"], p["b3"], 1),
        conv(x, p["w5"], p["b5"], 2),
        conv(x, p["wd"], p["bd"], 2, dil=2),
    ], axis=1)
    scale = p["gamma"] / jnp.sqrt(p["var"] + eps)
    y = (y - p["mean"][None, :, None, None]) * scale[None, :, None, None] \
        + p["beta"][None, :, None, None]
    return jnp.maximum(y, 0.0)


if __name__ == "__main__":
    B, Cin, Cout, H, W = 2, 4, 16, 16, 16
    Cout4 = Cout // 4

    key = jax.random.PRNGKey(0)
    ks = jax.random.split(key, 13)
    p = {
        "w1": jax.random.normal(ks[0], (Cout4, Cin, 1, 1), jnp.float32) * 0.1,
        "b1": jax.random.normal(ks[1], (Cout4,), jnp.float32) * 0.1,
        "w3": jax.random.normal(ks[2], (Cout4, Cin, 3, 3), jnp.float32) * 0.1,
        "b3": jax.random.normal(ks[3], (Cout4,), jnp.float32) * 0.1,
        "w5": jax.random.normal(ks[4], (Cout4, Cin, 5, 5), jnp.float32) * 0.1,
        "b5": jax.random.normal(ks[5], (Cout4,), jnp.float32) * 0.1,
        "wd": jax.random.normal(ks[6], (Cout4, Cin, 3, 3), jnp.float32) * 0.1,
        "bd": jax.random.normal(ks[7], (Cout4,), jnp.float32) * 0.1,
        "gamma": 1.0 + 0.1 * jax.random.normal(ks[8], (Cout,), jnp.float32),
        "beta": 0.1 * jax.random.normal(ks[9], (Cout,), jnp.float32),
        "mean": 0.1 * jax.random.normal(ks[10], (Cout,), jnp.float32),
        "var": jnp.abs(jax.random.normal(ks[11], (Cout,), jnp.float32)) + 0.5,
    }
    x = jax.random.normal(ks[12], (B, Cin, H, W), dtype=jnp.float32)

    out = jax.block_until_ready(multi_scale_conv(x, p))
    ref = _reference(x, p)

    assert out.shape == (B, Cout, H, W)
    assert jnp.allclose(out, ref, atol=1e-4, rtol=1e-4), \
        float(jnp.max(jnp.abs(out - ref)))

    print("KERNEL_OK")
</pallas_src>

<mosaic_0001>
module attributes {stable_mosaic.version = 11 : i64} {
  func.func @_msconv_kernel(%arg0: i32, %arg1: memref<1x4x324xf32, #tpu.memory_space<vmem>>, %arg2: memref<25x16x4xf32, #tpu.memory_space<vmem>>, %arg3: memref<16x1xf32, #tpu.memory_space<vmem>>, %arg4: memref<1x16x256xf32, #tpu.memory_space<vmem>>) attributes {dimension_semantics = [#tpu.dimension_semantics<parallel>], iteration_bounds = array<i64: 2>, scalar_prefetch = 0 : i64, scratch_operands = 0 : i64, tpu.core_type = #tpu.core_type<tc>, window_params = [{transform_indices = @transform_0, window_bounds = array<i64: 1, 4, 324>}, {pipeline_mode = #tpu.pipeline_mode<synchronous>, transform_indices = @transform_1, window_bounds = array<i64: 25, 16, 4>}, {pipeline_mode = #tpu.pipeline_mode<synchronous>, transform_indices = @transform_2, window_bounds = array<i64: 16, 1>}, {transform_indices = @transform_3, window_bounds = array<i64: 1, 16, 256>}]} {
    %c0 = arith.constant 0 : index
    %c0_0 = arith.constant 0 : index
    %c0_1 = arith.constant 0 : index
    %0 = vector.load %arg1[%c0, %c0_0, %c0_1] : memref<1x4x324xf32, #tpu.memory_space<vmem>>, vector<1x4x324xf32>
    %1 = vector.shape_cast %0 : vector<1x4x324xf32> to vector<4x324xf32>
    %2 = tpu.iota {dimensions = array<i32: 1>} : vector<4x256xi32>
    %c16_i32 = arith.constant 16 : i32
    %c0_i32 = arith.constant 0 : i32
    %3 = arith.cmpi eq, %c16_i32, %c0_i32 : i32
    %c1_i32 = arith.constant 1 : i32
    %4 = arith.select %3, %c1_i32, %c16_i32 : i32
    %5 = vector.broadcast %4 : i32 to vector<4x256xi32>
    %6 = arith.remsi %2, %5 : vector<4x256xi32>
    %c0_i32_2 = arith.constant 0 : i32
    %7 = vector.broadcast %c0_i32_2 : i32 to vector<4x256xi32>
    %8 = arith.cmpi ne, %6, %7 : vector<4x256xi32>
    %c0_i32_3 = arith.constant 0 : i32
    %9 = vector.broadcast %c0_i32_3 : i32 to vector<4x256xi32>
    %10 = arith.cmpi slt, %6, %9 : vector<4x256xi32>
    %c0_i32_4 = arith.constant 0 : i32
    %11 = arith.cmpi slt, %4, %c0_i32_4 : i32
    %12 = vector.broadcast %11 : i1 to vector<4x256xi1>
    %13 = vector.broadcast %12 : vector<4x256xi1> to vector<4x256xi1>
    %14 = arith.xori %10, %13 : vector<4x256xi1>
    %15 = arith.andi %14, %8 : vector<4x256xi1>
    %16 = vector.broadcast %4 : i32 to vector<4x256xi32>
    %17 = arith.addi %6, %16 : vector<4x256xi32>
    %18 = arith.select %15, %17, %6 : vector<4x256xi1>, vector<4x256xi32>
    %cst = arith.constant 0.000000e+00 : f32
    %19 = vector.broadcast %cst : f32 to vector<16x256xf32>
    %20 = vector.extract_strided_slice %1 {offsets = [0, 0], sizes = [4, 256], strides = [1, 1]} : vector<4x324xf32> to vector<4x256xf32>
    %c2_i32 = arith.constant 2 : i32
    %21 = vector.broadcast %c2_i32 : i32 to vector<4x256xi32>
    %22 = arith.cmpi sge, %18, %21 : vector<4x256xi32>
    %cst_5 = arith.constant 0.000000e+00 : f32
    %23 = vector.broadcast %cst_5 : f32 to vector<4x256xf32>
    %24 = arith.select %22, %20, %23 : vector<4x256xi1>, vector<4x256xf32>
    %c0_6 = arith.constant 0 : index
    %c0_7 = arith.constant 0 : index
    %c0_8 = arith.constant 0 : index
    %25 = vector.load %arg2[%c0_6, %c0_7, %c0_8] : memref<25x16x4xf32, #tpu.memory_space<vmem>>, vector<1x16x4xf32>
    %26 = vector.shape_cast %25 : vector<1x16x4xf32> to vector<16x4xf32>
    %cst_9 = arith.constant dense<0.000000e+00> : vector<16x256xf32>
    %27 = tpu.matmul %26, %24, %cst_9 {dimension_numbers = #tpu.dot_dimension_numbers<[1], [0], [0], [1], [0, 0, 1, 1], [], []>} : vector<16x4xf32>, vector<4x256xf32>, vector<16x256xf32> -> vector<16x256xf32>
    %28 = arith.addf %19, %27 : vector<16x256xf32>
    %29 = vector.extract_strided_slice %1 {offsets = [0, 1], sizes = [4, 256], strides = [1, 1]} : vector<4x324xf32> to vector<4x256xf32>
    %c1_i32_10 = arith.constant 1 : i32
    %30 = vector.broadcast %c1_i32_10 : i32 to vector<4x256xi32>
    %31 = arith.cmpi sge, %18, %30 : vector<4x256xi32>
    %cst_11 = arith.constant 0.000000e+00 : f32
    %32 = vector.broadcast %cst_11 : f32 to vector<4x256xf32>
    %33 = arith.select %31, %29, %32 : vector<4x256xi1>, vector<4x256xf32>
    %c1 = arith.constant 1 : index
    %c0_12 = arith.constant 0 : index
    %c0_13 = arith.constant 0 : index
    %34 = vector.load %arg2[%c1, %c0_12, %c0_13] : memref<25x16x4xf32, #tpu.memory_space<vmem>>, vector<1x16x4xf32>
    %35 = vector.shape_cast %34 : vector<1x16x4xf32> to vector<16x4xf32>
    %cst_14 = arith.constant dense<0.000000e+00> : vector<16x256xf32>
    %36 = tpu.matmul %35, %33, %cst_14 {dimension_numbers = #tpu.dot_dimension_numbers<[1], [0], [0], [1], [0, 0, 1, 1], [], []>} : vector<16x4xf32>, vector<4x256xf32>, vector<16x256xf32> -> vector<16x256xf32>
    %37 = arith.addf %28, %36 : vector<16x256xf32>
    %38 = vector.extract_strided_slice %1 {offsets = [0, 2], sizes = [4, 256], strides = [1, 1]} : vector<4x324xf32> to vector<4x256xf32>
    %c2 = arith.constant 2 : index
    %c0_15 = arith.constant 0 : index
    %c0_16 = arith.constant 0 : index
    %39 = vector.load %arg2[%c2, %c0_15, %c0_16] : memref<25x16x4xf32, #tpu.memory_space<vmem>>, vector<1x16x4xf32>
    %40 = vector.shape_cast %39 : vector<1x16x4xf32> to vector<16x4xf32>
    %cst_17 = arith.constant dense<0.000000e+00> : vector<16x256xf32>
    %41 = tpu.matmul %40, %38, %cst_17 {dimension_numbers = #tpu.dot_dimension_numbers<[1], [0], [0], [1], [0, 0, 1, 1], [], []>} : vector<16x4xf32>, vector<4x256xf32>, vector<16x256xf32> -> vector<16x256xf32>
    %42 = arith.addf %37, %41 : vector<16x256xf32>
    %43 = vector.extract_strided_slice %1 {offsets = [0, 3], sizes = [4, 256], strides = [1, 1]} : vector<4x324xf32> to vector<4x256xf32>
    %c15_i32 = arith.constant 15 : i32
    %44 = vector.broadcast %c15_i32 : i32 to vector<4x256xi32>
    %45 = arith.cmpi slt, %18, %44 : vector<4x256xi32>
    %cst_18 = arith.constant 0.000000e+00 : f32
    %46 = vector.broadcast %cst_18 : f32 to vector<4x256xf32>
    %47 = arith.select %45, %43, %46 : vector<4x256xi1>, vector<4x256xf32>
    %c3 = arith.constant 3 : index
    %c0_19 = arith.constant 0 : index
    %c0_20 = arith.constant 0 : index
    %48 = vector.load %arg2[%c3, %c0_19, %c0_20] : memref<25x16x4xf32, #tpu.memory_space<vmem>>, vector<1x16x4xf32>
    %49 = vector.shape_cast %48 : vector<1x16x4xf32> to vector<16x4xf32>
    %cst_21 = arith.constant dense<0.000000e+00> : vector<16x256xf32>
    %50 = tpu.matmul %49, %47, %cst_21 {dimension_numbers = #tpu.dot_dimension_numbers<[1], [0], [0], [1], [0, 0, 1, 1], [], []>} : vector<16x4xf32>, vector<4x256xf32>, vector<16x256xf32> -> vector<16x256xf32>
    %51 = arith.addf %42, %50 : vector<16x256xf32>
    %52 = vector.extract_strided_slice %1 {offsets = [0, 4], sizes = [4, 256], strides = [1, 1]} : vector<4x324xf32> to vector<4x256xf32>
    %c14_i32 = arith.constant 14 : i32
    %53 = vector.broadcast %c14_i32 : i32 to vector<4x256xi32>
    %54 = arith.cmpi slt, %18, %53 : vector<4x256xi32>
    %cst_22 = arith.constant 0.000000e+00 : f32
    %55 = vector.broadcast %cst_22 : f32 to vector<4x256xf32>
    %56 = arith.select %54, %52, %55 : vector<4x256xi1>, vector<4x256xf32>
    %c4 = arith.constant 4 : index
    %c0_23 = arith.constant 0 : index
    %c0_24 = arith.constant 0 : index
    %57 = vector.load %arg2[%c4, %c0_23, %c0_24] : memref<25x16x4xf32, #tpu.memory_space<vmem>>, vector<1x16x4xf32>
    %58 = vector.shape_cast %57 : vector<1x16x4xf32> to vector<16x4xf32>
    %cst_25 = arith.constant dense<0.000000e+00> : vector<16x256xf32>
    %59 = tpu.matmul %58, %56, %cst_25 {dimension_numbers = #tpu.dot_dimension_numbers<[1], [0], [0], [1], [0, 0, 1, 1], [], []>} : vector<16x4xf32>, vector<4x256xf32>, vector<16x256xf32> -> vector<16x256xf32>
    %60 = arith.addf %51, %59 : vector<16x256xf32>
    %61 = vector.extract_strided_slice %1 {offsets = [0, 16], sizes = [4, 256], strides = [1, 1]} : vector<4x324xf32> to vector<4x256xf32>
    %c2_i32_26 = arith.constant 2 : i32
    %62 = vector.broadcast %c2_i32_26 : i32 to vector<4x256xi32>
    %63 = arith.cmpi sge, %18, %62 : vector<4x256xi32>
    %cst_27 = arith.constant 0.000000e+00 : f32
    %64 = vector.broadcast %cst_27 : f32 to vector<4x256xf32>
    %65 = arith.select %63, %61, %64 : vector<4x256xi1>, vector<4x256xf32>
    %c5 = arith.constant 5 : index
    %c0_28 = arith.constant 0 : index
    %c0_29 = arith.constant 0 : index
    %66 = vector.load %arg2[%c5, %c0_28, %c0_29] : memref<25x16x4xf32, #tpu.memory_space<vmem>>, vector<1x16x4xf32>
    %67 = vector.shape_cast %66 : vector<1x16x4xf32> to vector<16x4xf32>
    %cst_30 = arith.constant dense<0.000000e+00> : vector<16x256xf32>
    %68 = tpu.matmul %67, %65, %cst_30 {dimension_numbers = #tpu.dot_dimension_numbers<[1], [0], [0], [1], [0, 0, 1, 1], [], []>} : vector<16x4xf32>, vector<4x256xf32>, vector<16x256xf32> -> vector<16x256xf32>
    %69 = arith.addf %60, %68 : vector<16x256xf32>
    %70 = vector.extract_strided_slice %1 {offsets = [0, 17], sizes = [4, 256], strides = [1, 1]} : vector<4x324xf32> to vector<4x256xf32>
    %c1_i32_31 = arith.constant 1 : i32
    %71 = vector.broadcast %c1_i32_31 : i32 to vector<4x256xi32>
    %72 = arith.cmpi sge, %18, %71 : vector<4x256xi32>
    %cst_32 = arith.constant 0.000000e+00 : f32
    %73 = vector.broadcast %cst_32 : f32 to vector<4x256xf32>
    %74 = arith.select %72, %70, %73 : vector<4x256xi1>, vector<4x256xf32>
    %c6 = arith.constant 6 : index
    %c0_33 = arith.constant 0 : index
    %c0_34 = arith.constant 0 : index
    %75 = vector.load %arg2[%c6, %c0_33, %c0_34] : memref<25x16x4xf32, #tpu.memory_space<vmem>>, vector<1x16x4xf32>
    %76 = vector.shape_cast %75 : vector<1x16x4xf32> to vector<16x4xf32>
    %cst_35 = arith.constant dense<0.000000e+00> : vector<16x256xf32>
    %77 = tpu.matmul %76, %74, %cst_35 {dimension_numbers = #tpu.dot_dimension_numbers<[1], [0], [0], [1], [0, 0, 1, 1], [], []>} : vector<16x4xf32>, vector<4x256xf32>, vector<16x256xf32> -> vector<16x256xf32>
    %78 = arith.addf %69, %77 : vector<16x256xf32>
    %79 = vector.extract_strided_slice %1 {offsets = [0, 18], sizes = [4, 256], strides = [1, 1]} : vector<4x324xf32> to vector<4x256xf32>
    %c7 = arith.constant 7 : index
    %c0_36 = arith.constant 0 : index
    %c0_37 = arith.constant 0 : index
    %80 = vector.load %arg2[%c7, %c0_36, %c0_37] : memref<25x16x4xf32, #tpu.memory_space<vmem>>, vector<1x16x4xf32>
    %81 = vector.shape_cast %80 : vector<1x16x4xf32> to vector<16x4xf32>
    %cst_38 = arith.constant dense<0.000000e+00> : vector<16x256xf32>
    %82 = tpu.matmul %81, %79, %cst_38 {dimension_numbers = #tpu.dot_dimension_numbers<[1], [0], [0], [1], [0, 0, 1, 1], [], []>} : vector<16x4xf32>, vector<4x256xf32>, vector<16x256xf32> -> vector<16x256xf32>
    %83 = arith.addf %78, %82 : vector<16x256xf32>
    %84 = vector.extract_strided_slice %1 {offsets = [0, 19], sizes = [4, 256], strides = [1, 1]} : vector<4x324xf32> to vector<4x256xf32>
    %c15_i32_39 = arith.constant 15 : i32
    %85 = vector.broadcast %c15_i32_39 : i32 to vector<4x256xi32>
    %86 = arith.cmpi slt, %18, %85 : vector<4x256xi32>
    %cst_40 = arith.constant 0.000000e+00 : f32
    %87 = vector.broadcast %cst_40 : f32 to vector<4x256xf32>
    %88 = arith.select %86, %84, %87 : vector<4x256xi1>, vector<4x256xf32>
    %c8 = arith.constant 8 : index
    %c0_41 = arith.constant 0 : index
    %c0_42 = arith.constant 0 : index
    %89 = vector.load %arg2[%c8, %c0_41, %c0_42] : memref<25x16x4xf32, #tpu.memory_space<vmem>>, vector<1x16x4xf32>
    %90 = vector.shape_cast %89 : vector<1x16x4xf32> to vector<16x4xf32>
    %cst_43 = arith.constant dense<0.000000e+00> : vector<16x256xf32>
    %91 = tpu.matmul %90, %88, %cst_43 {dimension_numbers = #tpu.dot_dimension_numbers<[1], [0], [0], [1], [0, 0, 1, 1], [], []>} : vector<16x4xf32>, vector<4x256xf32>, vector<16x256xf32> -> vector<16x256xf32>
    %92 = arith.addf %83, %91 : vector<16x256xf32>
    %93 = vector.extract_strided_slice %1 {offsets = [0, 20], sizes = [4, 256], strides = [1, 1]} : vector<4x324xf32> to vector<4x256xf32>
    %c14_i32_44 = arith.constant 14 : i32
    %94 = vector.broadcast %c14_i32_44 : i32 to vector<4x256xi32>
    %95 = arith.cmpi slt, %18, %94 : vector<4x256xi32>
    %cst_45 = arith.constant 0.000000e+00 : f32
    %96 = vector.broadcast %cst_45 : f32 to vector<4x256xf32>
    %97 = arith.select %95, %93, %96 : vector<4x256xi1>, vector<4x256xf32>
    %c9 = arith.constant 9 : index
    %c0_46 = arith.constant 0 : index
    %c0_47 = arith.constant 0 : index
    %98 = vector.load %arg2[%c9, %c0_46, %c0_47] : memref<25x16x4xf32, #tpu.memory_space<vmem>>, vector<1x16x4xf32>
    %99 = vector.shape_cast %98 : vector<1x16x4xf32> to vector<16x4xf32>
    %cst_48 = arith.constant dense<0.000000e+00> : vector<16x256xf32>
    %100 = tpu.matmul %99, %97, %cst_48 {dimension_numbers = #tpu.dot_dimension_numbers<[1], [0], [0], [1], [0, 0, 1, 1], [], []>} : vector<16x4xf32>, vector<4x256xf32>, vector<16x256xf32> -> vector<16x256xf32>
    %101 = arith.addf %92, %100 : vector<16x256xf32>
    %102 = vector.extract_strided_slice %1 {offsets = [0, 32], sizes = [4, 256], strides = [1, 1]} : vector<4x324xf32> to vector<4x256xf32>
    %c2_i32_49 = arith.constant 2 : i32
    %103 = vector.broadcast %c2_i32_49 : i32 to vector<4x256xi32>
    %104 = arith.cmpi sge, %18, %103 : vector<4x256xi32>
    %cst_50 = arith.constant 0.000000e+00 : f32
    %105 = vector.broadcast %cst_50 : f32 to vector<4x256xf32>
    %106 = arith.select %104, %102, %105 : vector<4x256xi1>, vector<4x256xf32>
    %c10 = arith.constant 10 : index
    %c0_51 = arith.constant 0 : index
    %c0_52 = arith.constant 0 : index
    %107 = vector.load %arg2[%c10, %c0_51, %c0_52] : memref<25x16x4xf32, #tpu.memory_space<vmem>>, vector<1x16x4xf32>
    %108 = vector.shape_cast %107 : vector<1x16x4xf32> to vector<16x4xf32>
    %cst_53 = arith.constant dense<0.000000e+00> : vector<16x256xf32>
    %109 = tpu.matmul %108, %106, %cst_53 {dimension_numbers = #tpu.dot_dimension_numbers<[1], [0], [0], [1], [0, 0, 1, 1], [], []>} : vector<16x4xf32>, vector<4x256xf32>, vector<16x256xf32> -> vector<16x256xf32>
    %110 = arith.addf %101, %109 : vector<16x256xf32>
    %111 = vector.extract_strided_slice %1 {offsets = [0, 33], sizes = [4, 256], strides = [1, 1]} : vector<4x324xf32> to vector<4x256xf32>
    %c1_i32_54 = arith.constant 1 : i32
    %112 = vector.broadcast %c1_i32_54 : i32 to vector<4x256xi32>
    %113 = arith.cmpi sge, %18, %112 : vector<4x256xi32>
    %cst_55 = arith.constant 0.000000e+00 : f32
    %114 = vector.broadcast %cst_55 : f32 to vector<4x256xf32>
    %115 = arith.select %113, %111, %114 : vector<4x256xi1>, vector<4x256xf32>
    %c11 = arith.constant 11 : index
    %c0_56 = arith.constant 0 : index
    %c0_57 = arith.constant 0 : index
    %116 = vector.load %arg2[%c11, %c0_56, %c0_57] : memref<25x16x4xf32, #tpu.memory_space<vmem>>, vector<1x16x4xf32>
    %117 = vector.shape_cast %116 : vector<1x16x4xf32> to vector<16x4xf32>
    %cst_58 = arith.constant dense<0.000000e+00> : vector<16x256xf32>
    %118 = tpu.matmul %117, %115, %cst_58 {dimension_numbers = #tpu.dot_dimension_numbers<[1], [0], [0], [1], [0, 0, 1, 1], [], []>} : vector<16x4xf32>, vector<4x256xf32>, vector<16x256xf32> -> vector<16x256xf32>
    %119 = arith.addf %110, %118 : vector<16x256xf32>
    %120 = vector.extract_strided_slice %1 {offsets = [0, 34], sizes = [4, 256], strides = [1, 1]} : vector<4x324xf32> to vector<4x256xf32>
    %c12 = arith.constant 12 : index
    %c0_59 = arith.constant 0 : index
    %c0_60 = arith.constant 0 : index
    %121 = vector.load %arg2[%c12, %c0_59, %c0_60] : memref<25x16x4xf32, #tpu.memory_space<vmem>>, vector<1x16x4xf32>
    %122 = vector.shape_cast %121 : vector<1x16x4xf32> to vector<16x4xf32>
    %cst_61 = arith.constant dense<0.000000e+00> : vector<16x256xf32>
    %123 = tpu.matmul %122, %120, %cst_61 {dimension_numbers = #tpu.dot_dimension_numbers<[1], [0], [0], [1], [0, 0, 1, 1], [], []>} : vector<16x4xf32>, vector<4x256xf32>, vector<16x256xf32> -> vector<16x256xf32>
    %124 = arith.addf %119, %123 : vector<16x256xf32>
    %125 = vector.extract_strided_slice %1 {offsets = [0, 35], sizes = [4, 256], strides = [1, 1]} : vector<4x324xf32> to vector<4x256xf32>
    %c15_i32_62 = arith.constant 15 : i32
    %126 = vector.broadcast %c15_i32_62 : i32 to vector<4x256xi32>
    %127 = arith.cmpi slt, %18, %126 : vector<4x256xi32>
    %cst_63 = arith.constant 0.000000e+00 : f32
    %128 = vector.broadcast %cst_63 : f32 to vector<4x256xf32>
    %129 = arith.select %127, %125, %128 : vector<4x256xi1>, vector<4x256xf32>
    %c13 = arith.constant 13 : index
    %c0_64 = arith.constant 0 : index
    %c0_65 = arith.constant 0 : index
    %130 = vector.load %arg2[%c13, %c0_64, %c0_65] : memref<25x16x4xf32, #tpu.memory_space<vmem>>, vector<1x16x4xf32>
    %131 = vector.shape_cast %130 : vector<1x16x4xf32> to vector<16x4xf32>
    %cst_66 = arith.constant dense<0.000000e+00> : vector<16x256xf32>
    %132 = tpu.matmul %131, %129, %cst_66 {dimension_numbers = #tpu.dot_dimension_numbers<[1], [0], [0], [1], [0, 0, 1, 1], [], []>} : vector<16x4xf32>, vector<4x256xf32>, vector<16x256xf32> -> vector<16x256xf32>
    %133 = arith.addf %124, %132 : vector<16x256xf32>
    %134 = vector.extract_strided_slice %1 {offsets = [0, 36], sizes = [4, 256], strides = [1, 1]} : vector<4x324xf32> to vector<4x256xf32>
    %c14_i32_67 = arith.constant 14 : i32
    %135 = vector.broadcast %c14_i32_67 : i32 to vector<4x256xi32>
    %136 = arith.cmpi slt, %18, %135 : vector<4x256xi32>
    %cst_68 = arith.constant 0.000000e+00 : f32
    %137 = vector.broadcast %cst_68 : f32 to vector<4x256xf32>
    %138 = arith.select %136, %134, %137 : vector<4x256xi1>, vector<4x256xf32>
    %c14 = arith.constant 14 : index
    %c0_69 = arith.constant 0 : index
    %c0_70 = arith.constant 0 : index
    %139 = vector.load %arg2[%c14, %c0_69, %c0_70] : memref<25x16x4xf32, #tpu.memory_space<vmem>>, vector<1x16x4xf32>
    %140 = vector.shape_cast %139 : vector<1x16x4xf32> to vector<16x4xf32>
    %cst_71 = arith.constant dense<0.000000e+00> : vector<16x256xf32>
    %141 = tpu.matmul %140, %138, %cst_71 {dimension_numbers = #tpu.dot_dimension_numbers<[1], [0], [0], [1], [0, 0, 1, 1], [], []>} : vector<16x4xf32>, vector<4x256xf32>, vector<16x256xf32> -> vector<16x256xf32>
    %142 = arith.addf %133, %141 : vector<16x256xf32>
    %143 = vector.extract_strided_slice %1 {offsets = [0, 48], sizes = [4, 256], strides = [1, 1]} : vector<4x324xf32> to vector<4x256xf32>
    %c2_i32_72 = arith.constant 2 : i32
    %144 = vector.broadcast %c2_i32_72 : i32 to vector<4x256xi32>
    %145 = arith.cmpi sge, %18, %144 : vector<4x256xi32>
    %cst_73 = arith.constant 0.000000e+00 : f32
    %146 = vector.broadcast %cst_73 : f32 to vector<4x256xf32>
    %147 = arith.select %145, %143, %146 : vector<4x256xi1>, vector<4x256xf32>
    %c15 = arith.constant 15 : index
    %c0_74 = arith.constant 0 : index
    %c0_75 = arith.constant 0 : index
    %148 = vector.load %arg2[%c15, %c0_74, %c0_75] : memref<25x16x4xf32, #tpu.memory_space<vmem>>, vector<1x16x4xf32>
    %149 = vector.shape_cast %148 : vector<1x16x4xf32> to vector<16x4xf32>
    %cst_76 = arith.constant dense<0.000000e+00> : vector<16x256xf32>
    %150 = tpu.matmul %149, %147, %cst_76 {dimension_numbers = #tpu.dot_dimension_numbers<[1], [0], [0], [1], [0, 0, 1, 1], [], []>} : vector<16x4xf32>, vector<4x256xf32>, vector<16x256xf32> -> vector<16x256xf32>
    %151 = arith.addf %142, %150 : vector<16x256xf32>
    %152 = vector.extract_strided_slice %1 {offsets = [0, 49], sizes = [4, 256], strides = [1, 1]} : vector<4x324xf32> to vector<4x256xf32>
    %c1_i32_77 = arith.constant 1 : i32
    %153 = vector.broadcast %c1_i32_77 : i32 to vector<4x256xi32>
    %154 = arith.cmpi sge, %18, %153 : vector<4x256xi32>
    %cst_78 = arith.constant 0.000000e+00 : f32
    %155 = vector.broadcast %cst_78 : f32 to vector<4x256xf32>
    %156 = arith.select %154, %152, %155 : vector<4x256xi1>, vector<4x256xf32>
    %c16 = arith.constant 16 : index
    %c0_79 = arith.constant 0 : index
    %c0_80 = arith.constant 0 : index
    %157 = vector.load %arg2[%c16, %c0_79, %c0_80] : memref<25x16x4xf32, #tpu.memory_space<vmem>>, vector<1x16x4xf32>
    %158 = vector.shape_cast %157 : vector<1x16x4xf32> to vector<16x4xf32>
    %cst_81 = arith.constant dense<0.000000e+00> : vector<16x256xf32>
    %159 = tpu.matmul %158, %156, %cst_81 {dimension_numbers = #tpu.dot_dimension_numbers<[1], [0], [0], [1], [0, 0, 1, 1], [], []>} : vector<16x4xf32>, vector<4x256xf32>, vector<16x256xf32> -> vector<16x256xf32>
    %160 = arith.addf %151, %159 : vector<16x256xf32>
    %161 = vector.extract_strided_slice %1 {offsets = [0, 50], sizes = [4, 256], strides = [1, 1]} : vector<4x324xf32> to vector<4x256xf32>
    %c17 = arith.constant 17 : index
    %c0_82 = arith.constant 0 : index
    %c0_83 = arith.constant 0 : index
    %162 = vector.load %arg2[%c17, %c0_82, %c0_83] : memref<25x16x4xf32, #tpu.memory_space<vmem>>, vector<1x16x4xf32>
    %163 = vector.shape_cast %162 : vector<1x16x4xf32> to vector<16x4xf32>
    %cst_84 = arith.constant dense<0.000000e+00> : vector<16x256xf32>
    %164 = tpu.matmul %163, %161, %cst_84 {dimension_numbers = #tpu.dot_dimension_numbers<[1], [0], [0], [1], [0, 0, 1, 1], [], []>} : vector<16x4xf32>, vector<4x256xf32>, vector<16x256xf32> -> vector<16x256xf32>
    %165 = arith.addf %160, %164 : vector<16x256xf32>
    %166 = vector.extract_strided_slice %1 {offsets = [0, 51], sizes = [4, 256], strides = [1, 1]} : vector<4x324xf32> to vector<4x256xf32>
    %c15_i32_85 = arith.constant 15 : i32
    %167 = vector.broadcast %c15_i32_85 : i32 to vector<4x256xi32>
    %168 = arith.cmpi slt, %18, %167 : vector<4x256xi32>
    %cst_86 = arith.constant 0.000000e+00 : f32
    %169 = vector.broadcast %cst_86 : f32 to vector<4x256xf32>
    %170 = arith.select %168, %166, %169 : vector<4x256xi1>, vector<4x256xf32>
    %c18 = arith.constant 18 : index
    %c0_87 = arith.constant 0 : index
    %c0_88 = arith.constant 0 : index
    %171 = vector.load %arg2[%c18, %c0_87, %c0_88] : memref<25x16x4xf32, #tpu.memory_space<vmem>>, vector<1x16x4xf32>
    %172 = vector.shape_cast %171 : vector<1x16x4xf32> to vector<16x4xf32>
    %cst_89 = arith.constant dense<0.000000e+00> : vector<16x256xf32>
    %173 = tpu.matmul %172, %170, %cst_89 {dimension_numbers = #tpu.dot_dimension_numbers<[1], [0], [0], [1], [0, 0, 1, 1], [], []>} : vector<16x4xf32>, vector<4x256xf32>, vector<16x256xf32> -> vector<16x256xf32>
    %174 = arith.addf %165, %173 : vector<16x256xf32>
    %175 = vector.extract_strided_slice %1 {offsets = [0, 52], sizes = [4, 256], strides = [1, 1]} : vector<4x324xf32> to vector<4x256xf32>
    %c14_i32_90 = arith.constant 14 : i32
    %176 = vector.broadcast %c14_i32_90 : i32 to vector<4x256xi32>
    %177 = arith.cmpi slt, %18, %176 : vector<4x256xi32>
    %cst_91 = arith.constant 0.000000e+00 : f32
    %178 = vector.broadcast %cst_91 : f32 to vector<4x256xf32>
    %179 = arith.select %177, %175, %178 : vector<4x256xi1>, vector<4x256xf32>
    %c19 = arith.constant 19 : index
    %c0_92 = arith.constant 0 : index
    %c0_93 = arith.constant 0 : index
    %180 = vector.load %arg2[%c19, %c0_92, %c0_93] : memref<25x16x4xf32, #tpu.memory_space<vmem>>, vector<1x16x4xf32>
    %181 = vector.shape_cast %180 : vector<1x16x4xf32> to vector<16x4xf32>
    %cst_94 = arith.constant dense<0.000000e+00> : vector<16x256xf32>
    %182 = tpu.matmul %181, %179, %cst_94 {dimension_numbers = #tpu.dot_dimension_numbers<[1], [0], [0], [1], [0, 0, 1, 1], [], []>} : vector<16x4xf32>, vector<4x256xf32>, vector<16x256xf32> -> vector<16x256xf32>
    %183 = arith.addf %174, %182 : vector<16x256xf32>
    %184 = vector.extract_strided_slice %1 {offsets = [0, 64], sizes = [4, 256], strides = [1, 1]} : vector<4x324xf32> to vector<4x256xf32>
    %c2_i32_95 = arith.constant 2 : i32
    %185 = vector.broadcast %c2_i32_95 : i32 to vector<4x256xi32>
    %186 = arith.cmpi sge, %18, %185 : vector<4x256xi32>
    %cst_96 = arith.constant 0.000000e+00 : f32
    %187 = vector.broadcast %cst_96 : f32 to vector<4x256xf32>
    %188 = arith.select %186, %184, %187 : vector<4x256xi1>, vector<4x256xf32>
    %c20 = arith.constant 20 : index
    %c0_97 = arith.constant 0 : index
    %c0_98 = arith.constant 0 : index
    %189 = vector.load %arg2[%c20, %c0_97, %c0_98] : memref<25x16x4xf32, #tpu.memory_space<vmem>>, vector<1x16x4xf32>
    %190 = vector.shape_cast %189 : vector<1x16x4xf32> to vector<16x4xf32>
    %cst_99 = arith.constant dense<0.000000e+00> : vector<16x256xf32>
    %191 = tpu.matmul %190, %188, %cst_99 {dimension_numbers = #tpu.dot_dimension_numbers<[1], [0], [0], [1], [0, 0, 1, 1], [], []>} : vector<16x4xf32>, vector<4x256xf32>, vector<16x256xf32> -> vector<16x256xf32>
    %192 = arith.addf %183, %191 : vector<16x256xf32>
    %193 = vector.extract_strided_slice %1 {offsets = [0, 65], sizes = [4, 256], strides = [1, 1]} : vector<4x324xf32> to vector<4x256xf32>
    %c1_i32_100 = arith.constant 1 : i32
    %194 = vector.broadcast %c1_i32_100 : i32 to vector<4x256xi32>
    %195 = arith.cmpi sge, %18, %194 : vector<4x256xi32>
    %cst_101 = arith.constant 0.000000e+00 : f32
    %196 = vector.broadcast %cst_101 : f32 to vector<4x256xf32>
    %197 = arith.select %195, %193, %196 : vector<4x256xi1>, vector<4x256xf32>
    %c21 = arith.constant 21 : index
    %c0_102 = arith.constant 0 : index
    %c0_103 = arith.constant 0 : index
    %198 = vector.load %arg2[%c21, %c0_102, %c0_103] : memref<25x16x4xf32, #tpu.memory_space<vmem>>, vector<1x16x4xf32>
    %199 = vector.shape_cast %198 : vector<1x16x4xf32> to vector<16x4xf32>
    %cst_104 = arith.constant dense<0.000000e+00> : vector<16x256xf32>
    %200 = tpu.matmul %199, %197, %cst_104 {dimension_numbers = #tpu.dot_dimension_numbers<[1], [0], [0], [1], [0, 0, 1, 1], [], []>} : vector<16x4xf32>, vector<4x256xf32>, vector<16x256xf32> -> vector<16x256xf32>
    %201 = arith.addf %192, %200 : vector<16x256xf32>
    %202 = vector.extract_strided_slice %1 {offsets = [0, 66], sizes = [4, 256], strides = [1, 1]} : vector<4x324xf32> to vector<4x256xf32>
    %c22 = arith.constant 22 : index
    %c0_105 = arith.constant 0 : index
    %c0_106 = arith.constant 0 : index
    %203 = vector.load %arg2[%c22, %c0_105, %c0_106] : memref<25x16x4xf32, #tpu.memory_space<vmem>>, vector<1x16x4xf32>
    %204 = vector.shape_cast %203 : vector<1x16x4xf32> to vector<16x4xf32>
    %cst_107 = arith.constant dense<0.000000e+00> : vector<16x256xf32>
    %205 = tpu.matmul %204, %202, %cst_107 {dimension_numbers = #tpu.dot_dimension_numbers<[1], [0], [0], [1], [0, 0, 1, 1], [], []>} : vector<16x4xf32>, vector<4x256xf32>, vector<16x256xf32> -> vector<16x256xf32>
    %206 = arith.addf %201, %205 : vector<16x256xf32>
    %207 = vector.extract_strided_slice %1 {offsets = [0, 67], sizes = [4, 256], strides = [1, 1]} : vector<4x324xf32> to vector<4x256xf32>
    %c15_i32_108 = arith.constant 15 : i32
    %208 = vector.broadcast %c15_i32_108 : i32 to vector<4x256xi32>
    %209 = arith.cmpi slt, %18, %208 : vector<4x256xi32>
    %cst_109 = arith.constant 0.000000e+00 : f32
    %210 = vector.broadcast %cst_109 : f32 to vector<4x256xf32>
    %211 = arith.select %209, %207, %210 : vector<4x256xi1>, vector<4x256xf32>
    %c23 = arith.constant 23 : index
    %c0_110 = arith.constant 0 : index
    %c0_111 = arith.constant 0 : index
    %212 = vector.load %arg2[%c23, %c0_110, %c0_111] : memref<25x16x4xf32, #tpu.memory_space<vmem>>, vector<1x16x4xf32>
    %213 = vector.shape_cast %212 : vector<1x16x4xf32> to vector<16x4xf32>
    %cst_112 = arith.constant dense<0.000000e+00> : vector<16x256xf32>
    %214 = tpu.matmul %213, %211, %cst_112 {dimension_numbers = #tpu.dot_dimension_numbers<[1], [0], [0], [1], [0, 0, 1, 1], [], []>} : vector<16x4xf32>, vector<4x256xf32>, vector<16x256xf32> -> vector<16x256xf32>
    %215 = arith.addf %206, %214 : vector<16x256xf32>
    %216 = vector.extract_strided_slice %1 {offsets = [0, 68], sizes = [4, 256], strides = [1, 1]} : vector<4x324xf32> to vector<4x256xf32>
    %c14_i32_113 = arith.constant 14 : i32
    %217 = vector.broadcast %c14_i32_113 : i32 to vector<4x256xi32>
    %218 = arith.cmpi slt, %18, %217 : vector<4x256xi32>
    %cst_114 = arith.constant 0.000000e+00 : f32
    %219 = vector.broadcast %cst_114 : f32 to vector<4x256xf32>
    %220 = arith.select %218, %216, %219 : vector<4x256xi1>, vector<4x256xf32>
    %c24 = arith.constant 24 : index
    %c0_115 = arith.constant 0 : index
    %c0_116 = arith.constant 0 : index
    %221 = vector.load %arg2[%c24, %c0_115, %c0_116] : memref<25x16x4xf32, #tpu.memory_space<vmem>>, vector<1x16x4xf32>
    %222 = vector.shape_cast %221 : vector<1x16x4xf32> to vector<16x4xf32>
    %cst_117 = arith.constant dense<0.000000e+00> : vector<16x256xf32>
    %223 = tpu.matmul %222, %220, %cst_117 {dimension_numbers = #tpu.dot_dimension_numbers<[1], [0], [0], [1], [0, 0, 1, 1], [], []>} : vector<16x4xf32>, vector<4x256xf32>, vector<16x256xf32> -> vector<16x256xf32>
    %224 = arith.addf %215, %223 : vector<16x256xf32>
    %c0_118 = arith.constant 0 : index
    %c0_119 = arith.constant 0 : index
    %225 = vector.load %arg3[%c0_118, %c0_119] : memref<16x1xf32, #tpu.memory_space<vmem>>, vector<16x1xf32>
    %226 = vector.broadcast %225 : vector<16x1xf32> to vector<16x256xf32>
    %227 = arith.addf %224, %226 : vector<16x256xf32>
    %cst_120 = arith.constant 0.000000e+00 : f32
    %228 = vector.broadcast %cst_120 : f32 to vector<16x256xf32>
    %229 = arith.maximumf %227, %228 : vector<16x256xf32>
    %c0_121 = arith.constant 0 : index
    %c0_122 = arith.constant 0 : index
    %c0_123 = arith.constant 0 : index
    %230 = vector.load %arg4[%c0_121, %c0_122, %c0_123] : memref<1x16x256xf32, #tpu.memory_space<vmem>>, vector<1x16x256xf32>
    %231 = vector.shape_cast %230 : vector<1x16x256xf32> to vector<16x256xf32>
    %232 = vector.shape_cast %229 : vector<16x256xf32> to vector<1x16x256xf32>
    tpu.vector_store %arg4[%c0_121, %c0_122, %c0_123], %232 {strides = array<i32>} : memref<1x16x256xf32, #tpu.memory_space<vmem>>, vector<1x16x256xf32>,
    return
  }
  func.func @transform_0(%arg0: i32) -> (i32, i32, i32) {
    %c0_i32 = arith.constant 0 : i32
    %c0_i32_0 = arith.constant 0 : i32
    %c0_i32_1 = arith.constant 0 : i32
    return %arg0, %c0_i32, %c0_i32_0 : i32, i32, i32
  }
  func.func @transform_1(%arg0: i32) -> (i32, i32, i32) {
    %c0_i32 = arith.constant 0 : i32
    %c0_i32_0 = arith.constant 0 : i32
    %c0_i32_1 = arith.constant 0 : i32
    %c0_i32_2 = arith.constant 0 : i32
    return %c0_i32, %c0_i32_0, %c0_i32_1 : i32, i32, i32
  }
  func.func @transform_2(%arg0: i32) -> (i32, i32) {
    %c0_i32 = arith.constant 0 : i32
    %c0_i32_0 = arith.constant 0 : i32
    %c0_i32_1 = arith.constant 0 : i32
    return %c0_i32, %c0_i32_0 : i32, i32
  }
  func.func @transform_3(%arg0: i32) -> (i32, i32, i32) {
    %c0_i32 = arith.constant 0 : i32
    %c0_i32_0 = arith.constant 0 : i32
    %c0_i32_1 = arith.constant 0 : i32
    return %arg0, %c0_i32, %c0_i32_0 : i32, i32, i32
  }
}

</mosaic_0001>

<llo_original>
// kernel: tpu_custom_call.1
$region0: #{tpu_custom_call.1}
  #allocation0 [shape = 'u32[]', space=smem, size = 0x4, offset = 0x4, fixed_abs, tag = 'smem constant byte address 0x4 - core index']
  #allocation1 [shape = 'u32[72,128]{1,0:T(1,128)}', space=vmem, size = 0x9000, scoped, tag = 'internal scratch']
  %s0 = inlined_call_operand.vmem [shape: f32[2,4,324], index: 0, kind: input, shape index: {}]
  %s1 = inlined_call_operand.vmem [shape: f32[25,16,4], index: 1, kind: input, shape index: {}]
  %s2 = inlined_call_operand.vmem [shape: f32[16,1], index: 2, kind: input, shape index: {}]
  %s3 = inlined_call_operand.hbm [shape: f32[2,16,256], index: 3, kind: output, shape index: {}]
  %s4 = sld [smem:[#allocation0]]
  $region45: #{tpu_custom_call.1} parent=0
    _
  %s6 = ssub.s32 1, %s4
  %s7 = scalar_select 0, %s6, %s4
  $region1: #{tpu_custom_call.1} parent=0
    #allocation2 [shape = 'u8[32768]{0}', space=vmem, size = 0x8000, scoped, tag = 'output window, operand 0']
    #allocation3 [shape = 's32[2]{0}', space=sflag, size = 0x8, scoped, tag = 'scoped memory for tpu_custom_call.1']
    %8 = vsyncpa [#allocation3], 0
    %s9 = scalar_lea.sflag [#allocation3], 1
    %10 = vsyncpa %s9, 0
    loop: start=0, step=1, limit=4
    $region2: #{tpu_custom_call.1} parent=1 // loop_pre_header
      _
    $region3: #{tpu_custom_call.1} parent=1 // loop_header
      %s12 = sphi 0, %s16
      %p13 = scmp.ge.s32.totalorder %s12, 4
      %s22 = sphi 0, %s24
      %s25 = sphi 0, %s22
      %s26 = sphi 0, %s25
      %s42 = sphi 0, %s26
      %s46 = sphi 0, %s46
      %s48 = sphi 0, %s46
      %s49 = sphi 0, %s48
      %s63 = sphi 0, %s49
      %s67 = sphi 0, %s67
      %s69 = sphi 0, %s67
      %s70 = sphi 0, %s69
      %s84 = sphi 0, %s70
      %s90 = sphi 0, %s92
      %s93 = sphi 0, %s90
      %s94 = sphi 0, %s93
      %s110 = sphi 0, %s94
    $region4: #{tpu_custom_call.1} parent=1 // loop_header_branch
      %15 = sbr.rel (%p13) target = $region8
    $region5: #{tpu_custom_call.1} parent=1 // loop_body
      %s17 = ssub.s32 %s12, 1
      %s18 = ssub.s32 %s12, 2
      %s19 = sadd.s32 %s12, 1
      %s20 = ssub.s32 %s12, %s19
      %p21 = scmp.eq.s32.totalorder %s20, 0
      %s23 = sadd.s32 %s22, 1
      %s24 = scalar_select %p21, %s22, %s23
      %p27 = pneg %p21
      %p28 = scmp.eq.s32.totalorder %s12, 1
      %p29 = por %p27, %p28
      %p30 = scmp.ne.s32.totalorder %s22, %s25
      %p31 = scmp.eq.s32.totalorder %s12, 0
      %p32 = por %p30, %p31
      %p33 = scmp.ne.s32.totalorder %s22, %s25
      %p34 = scmp.eq.s32.totalorder %s17, 1
      %p35 = por %p33, %p34
      %p36 = scmp.ne.s32.totalorder %s25, %s26
      %p37 = scmp.eq.s32.totalorder %s17, 0
      %p38 = por %p36, %p37
      %p39 = scmp.ne.s32.totalorder %s25, %s26
      %p40 = scmp.eq.s32.totalorder %s18, 1
      %p41 = por %p39, %p40
      %p43 = scmp.ne.s32.totalorder %s26, %s42
      %p44 = scmp.eq.s32.totalorder %s18, 0
      %p45 = por %p43, %p44
      %s47 = sadd.s32 %s46, 1
      %p50 = scmp.eq.s32.totalorder %s12, 1
      %p51 = scmp.ne.s32.totalorder %s46, %s48
      %p52 = scmp.eq.s32.totalorder %s12, 0
      %p53 = por %p51, %p52
      %p54 = scmp.ne.s32.totalorder %s46, %s48
      %p55 = scmp.eq.s32.totalorder %s17, 1
      %p56 = por %p54, %p55
      %p57 = scmp.ne.s32.totalorder %s48, %s49
      %p58 = scmp.eq.s32.totalorder %s17, 0
      %p59 = por %p57, %p58
      %p60 = scmp.ne.s32.totalorder %s48, %s49
      %p61 = scmp.eq.s32.totalorder %s18, 1
      %p62 = por %p60, %p61
      %p64 = scmp.ne.s32.totalorder %s49, %s63
      %p65 = scmp.eq.s32.totalorder %s18, 0
      %p66 = por %p64, %p65
      %s68 = sadd.s32 %s67, 1
      %p71 = scmp.eq.s32.totalorder %s12, 1
      %p72 = scmp.ne.s32.totalorder %s67, %s69
      %p73 = scmp.eq.s32.totalorder %s12, 0
      %p74 = por %p72, %p73
      %p75 = scmp.ne.s32.totalorder %s67, %s69
      %p76 = scmp.eq.s32.totalorder %s17, 1
      %p77 = por %p75, %p76
      %p78 = scmp.ne.s32.totalorder %s69, %s70
      %p79 = scmp.eq.s32.totalorder %s17, 0
      %p80 = por %p78, %p79
      %p81 = scmp.ne.s32.totalorder %s69, %s70
      %p82 = scmp.eq.s32.totalorder %s18, 1
      %p83 = por %p81, %p82
      %p85 = scmp.ne.s32.totalorder %s70, %s84
      %p86 = scmp.eq.s32.totalorder %s18, 0
      %p87 = por %p85, %p86
      %s88 = ssub.s32 %s12, %s19
      %p89 = scmp.eq.s32.totalorder %s88, 0
      %s91 = sadd.s32 %s90, 1
      %s92 = scalar_select %p89, %s90, %s91
      %p95 = pneg %p89
      %p96 = scmp.eq.s32.totalorder %s12, 1
      %p97 = por %p95, %p96
      %p98 = scmp.ne.s32.totalorder %s90, %s93
      %p99 = scmp.eq.s32.totalorder %s12, 0
      %p100 = por %p98, %p99
      %p101 = scmp.ne.s32.totalorder %s90, %s93
      %p102 = scmp.eq.s32.totalorder %s17, 1
      %p103 = por %p101, %p102
      %p104 = scmp.ne.s32.totalorder %s93, %s94
      %p105 = scmp.eq.s32.totalorder %s17, 0
      %p106 = por %p104, %p105
      %p107 = scmp.ne.s32.totalorder %s93, %s94
      %p108 = scmp.eq.s32.totalorder %s18, 1
      %p109 = por %p107, %p108
      %p111 = scmp.ne.s32.totalorder %s94, %s110
      %p112 = scmp.eq.s32.totalorder %s18, 0
      %p113 = por %p111, %p112
      %p114 = scmp.le.s32.totalorder 1, %s12
      %p115 = scmp.lt.s32.totalorder %s12, 3
      %p116 = pnand %p114, %p115
      %p117 = pneg %p116
      // Predicated region
      $region9: #{tpu_custom_call.1} parent=5 // pred_check
        _
      $region10: #{tpu_custom_call.1} parent=5 // pred_check_branch
        %119 = sbr.rel (%p116) target = $region12
      $region11: #{tpu_custom_call.1} parent=5 // pred_region
        %s120 = ssub.s32 %s12, 1
        // Predicated region
        $region13: #{tpu_custom_call.1} parent=11 // pred_check
          %p121 = pneg %p59
        $region14: #{tpu_custom_call.1} parent=11 // pred_check_branch
          %123 = sbr.rel (%p121) target = $region16
        $region15: #{tpu_custom_call.1} parent=11 // pred_region
          _
        $region16: #{tpu_custom_call.1} parent=11 // pred_fallthru
          _
        // Predicated region
        $region17: #{tpu_custom_call.1} parent=11 // pred_check
          %p124 = pneg %p80
        $region18: #{tpu_custom_call.1} parent=11 // pred_check_branch
          %126 = sbr.rel (%p124) target = $region20
        $region19: #{tpu_custom_call.1} parent=11 // pred_region
          _
        $region20: #{tpu_custom_call.1} parent=11 // pred_fallthru
          _
      $region12: #{tpu_custom_call.1} parent=5 // pred_fallthru
        _
      %p127 = scmp.lt.s32.totalorder %s12, 2
      // Predicated region
      $region21: #{tpu_custom_call.1} parent=5 // pred_check
        %p128 = pneg %p127
      $region22: #{tpu_custom_call.1} parent=5 // pred_check_branch
        %130 = sbr.rel (%p128) target = $region24
      $region23: #{tpu_custom_call.1} parent=5 // pred_region
        // Predicated region
        $region25: #{tpu_custom_call.1} parent=23 // pred_check
          %p131 = pneg %p32
        $region26: #{tpu_custom_call.1} parent=23 // pred_check_branch
          %133 = sbr.rel (%p131) target = $region28
        $region27: #{tpu_custom_call.1} parent=23 // pred_region
          %p134 = scmp.lt.s32.totalorder %s12, 1
          %s135 = scalar_select %p134, %s12, 1
          %s136 = smul.addr %s135, 3
          %s137 = smul.addr %s136, 4
          %s138 = scalar_lea.vmem %s0, %s137
        $region28: #{tpu_custom_call.1} parent=23 // pred_fallthru
          _
      $region24: #{tpu_custom_call.1} parent=5 // pred_fallthru
        _
      %p139 = scmp.le.s32.totalorder 1, %s12
      %p140 = scmp.lt.s32.totalorder %s12, 3
      %p141 = pnand %p139, %p140
      %p142 = pneg %p141
      // Predicated region
      $region29: #{tpu_custom_call.1} parent=5 // pred_check
        _
      $region30: #{tpu_custom_call.1} parent=5 // pred_check_branch
        %144 = sbr.rel (%p141) target = $region32
      $region31: #{tpu_custom_call.1} parent=5 // pred_region
        %s145 = ssub.s32 %s12, 1
        %p146 = scmp.lt.s32.totalorder %s17, 1
        %s147 = scalar_select %p146, %s17, 1
        %s148 = smul.addr %s147, 3
        %s149 = smul.addr %s148, 4
        %s150 = scalar_lea.vmem %s0, %s149
        %p151 = pneg %p38
        %p152 = pneg %p35
        %p153 = pneg %p59
        %p154 = pneg %p56
        %p155 = pneg %p80
        %p156 = pneg %p77
        %p157 = pneg %p106
        %p158 = pneg %p103
        %s159 = sand.u32 %s93, 1
        %s160 = scalar_lea.sflag [#allocation3], %s159
        %s161 = sand.u32 %s93, 1
        %s162 = smul.addr %s161, 32
        %s163 = scalar_lea.vmem [#allocation2], %s162
        %p164 = scmp.lt.s32.totalorder %s17, 1
        %s165 = scalar_select %p164, %s17, 1
        %s166 = smul.addr %s165, 3
        %s167 = smul.addr %s166, 4
        %s168 = scalar_lea.vmem %s0, %s167
        %v169 = vld [vmem:[%s168] sm:$0xff]
        %v170 = vld [vmem:[%s168 + $0x8] sm:$0xf]
        %v171 = vlaneseq
        %v172 = vand.u32 %v171, 127
        %v173 = vadd.s32 %v172, 128
        %vm174 = vcmp.lt.s32.totalorder %v172, 0
        %v175 = vsub.s32 0, %v172
        %v176 = vsel %vm174, %v175, %v172
        %v177 = vshrl.u32 %v176, 4
        %v178 = vand.u32 %v176, 15
        %v179 = vsub.s32 0, %v178
        %v180 = vsel %vm174, %v179, %v178
        %vm181 = vcmp.lt.s32.totalorder %v173, 0
        %v182 = vsub.s32 0, %v173
        %v183 = vsel %vm181, %v182, %v173
        %v184 = vshrl.u32 %v183, 4
        %v185 = vand.u32 %v183, 15
        %v186 = vsub.s32 0, %v185
        %v187 = vsel %vm181, %v186, %v185
        %vm188 = vcmp.ne.s32.totalorder %v180, 0
        %vm189 = vcmp.ne.s32.totalorder %v187, 0
        %vm190 = vcmp.lt.s32.totalorder %v180, 0
        %vm191 = vcmp.lt.s32.totalorder %v187, 0
        %vm192 = vmand %vm190, %vm188
        %vm193 = vmand %vm191, %vm189
        %v194 = vadd.s32 %v180, 16
        %v195 = vadd.s32 %v187, 16
        %v196 = vsel %vm192, %v194, %v180
        %v197 = vsel %vm193, %v195, %v187
        %vm198 = vcmp.ge.s32.totalorder %v196, 2
        %vm199 = vcmp.ge.s32.totalorder %v197, 2
        %201 = vst [vmem:[#allocation1] ss:$2 sm:$0xff] %v169
        %v202 = vld.sshfl [vmem:[#allocation1] sm:$0xff pattern:$0x75316420]
        %v203 = vld.sshfl [vmem:[#allocation1 + $0x8] sm:$0xff pattern:$0x75316420]
        %v206 = vsel %vm198, %v202, 0.0
        %v207 = vsel %vm199, %v203, 0.0
        %v208 = vld [vmem:[%s1] sm:$0xff]
        %v209 = vld [vmem:[%s1 + $0x8] sm:$0xff]
        %vm210 = vcmp.ge.s32.totalorder %v196, 1
        %vm211 = vcmp.ge.s32.totalorder %v197, 1
        %213 = vst [vmem:[#allocation1] ss:$2 sm:$0xff] %v169
        %s214 = scalar_lea.vmem [#allocation1], 16
        %215 = vst [vmem:[%s214] ss:$2 sm:$0xff] %v170
        %v216 = vld.sshfl [vmem:[#allocation1] sm:$0xff pattern:$0x75316420]
        %v217 = vld.sshfl [vmem:[#allocation1 + $0x8] sm:$0xff pattern:$0x75316420]
        %v218 = vld.sshfl [vmem:[#allocation1 + $0x10] sm:$0xff pattern:$0x75316420]
        %219 = vrot.lane.b32.xlu0 %v216, 127
        %v220 = vpop.permute.xlu0 %219
        %221 = vrot.lane.b32.xlu0 %v217, 127
        %v222 = vpop.permute.xlu0 %221
        %223 = vrot.lane.b32.xlu0 %v218, 127
        %v224 = vpop.permute.xlu0 %223
        %vm225 = vcmask 1039360
        %v226 = vsel %vm225, %v220, %v222
        %v227 = vsel %vm225, %v222, %v224
        %v230 = vsel %vm210, %v226, 0.0
        %v231 = vsel %vm211, %v227, 0.0
        %s232 = scalar_lea.vmem %s1, 16
        %v233 = vld [vmem:[%s232] sm:$0xff]
        %v234 = vld [vmem:[%s232 + $0x8] sm:$0xff]
        %vm235 = vcmask 31744
        %v237 = vsel %vm235, %v233, 0
        %v240 = vsel %vm235, %v234, 0
        %vm242 = vcmask 1043456
        %v244 = vsel %vm242, %v230, 0
        %v247 = vsel %vm242, %v231, 0
        %249 = vmatpush.msra.mxu0 0.0
        %250 = vmatpush.msra.mxu0 0.0
        %251 = vmatpush.msra.mxu0 0.0
        %252 = vmatpush.msra.mxu0 0.0
        %253 = vmatpush.msra.mxu0 0.0
        %254 = vmatpush.msra.mxu0 0.0
        %255 = vmatpush.msra.mxu0 0.0
        %256 = vmatpush.msra.mxu0 0.0
        %257 = vmatpush.msra.mxu0 0.0
        %258 = vmatpush.msra.mxu0 0.0
        %259 = vmatpush.msra.mxu0 0.0
        %260 = vmatpush.msra.mxu0 0.0
        %261 = vmatpush.msra.mxu0 0.0
        %262 = vmatpush.msra.mxu0 0.0
        %263 = vmatpush.msra.mxu0 0.0
        %264 = vmatpush.msra.mxu0 %v244
        %265 = vmatmul.f32.gmra.mxu0 %v237
        %v266 = vpop.f32.mrf.mxu0
        %v267 = vadd.f32 0.0, %v266
        %268 = vmatmul.f32.gmra.mxu0 %v240
        %v269 = vpop.f32.mrf.mxu0
        %v270 = vadd.f32 0.0, %v269
        %271 = vdwg.mxu0
        %272 = vmatpush.msra.mxu0 0.0
        %273 = vmatpush.msra.mxu0 0.0
        %274 = vmatpush.msra.mxu0 0.0
        %275 = vmatpush.msra.mxu0 0.0
        %276 = vmatpush.msra.mxu0 0.0
        %277 = vmatpush.msra.mxu0 0.0
        %278 = vmatpush.msra.mxu0 0.0
        %279 = vmatpush.msra.mxu0 0.0
        %280 = vmatpush.msra.mxu0 0.0
        %281 = vmatpush.msra.mxu0 0.0
        %282 = vmatpush.msra.mxu0 0.0
        %283 = vmatpush.msra.mxu0 0.0
        %284 = vmatpush.msra.mxu0 0.0
        %285 = vmatpush.msra.mxu0 0.0
        %286 = vmatpush.msra.mxu0 0.0
        %287 = vmatpush.msra.mxu0 %v247
        %288 = vmatmul.f32.gmra.mxu0 %v237
        %v289 = vpop.f32.mrf.mxu0
        %v290 = vadd.f32 0.0, %v289
        %291 = vmatmul.f32.gmra.mxu0 %v240
        %v292 = vpop.f32.mrf.mxu0
        %v293 = vadd.f32 0.0, %v292
        %294 = vdwg.mxu0
        %v296 = vsel %vm235, %v208, 0
        %v299 = vsel %vm235, %v209, 0
        %v302 = vsel %vm242, %v206, 0
        %v305 = vsel %vm242, %v207, 0
        %307 = vmatpush.msra.mxu0 0.0
        %308 = vmatpush.msra.mxu0 0.0
        %309 = vmatpush.msra.mxu0 0.0
        %310 = vmatpush.msra.mxu0 0.0
        %311 = vmatpush.msra.mxu0 0.0
        %312 = vmatpush.msra.mxu0 0.0
        %313 = vmatpush.msra.mxu0 0.0
        %314 = vmatpush.msra.mxu0 0.0
        %315 = vmatpush.msra.mxu0 0.0
        %316 = vmatpush.msra.mxu0 0.0
        %317 = vmatpush.msra.mxu0 0.0
        %318 = vmatpush.msra.mxu0 0.0
        %319 = vmatpush.msra.mxu0 0.0
        %320 = vmatpush.msra.mxu0 0.0
        %321 = vmatpush.msra.mxu0 0.0
        %322 = vmatpush.msra.mxu0 %v302
        %323 = vmatmul.f32.gmra.mxu0 %v296
        %v324 = vpop.f32.mrf.mxu0
        %v325 = vadd.f32 %v267, %v324
        %326 = vmatmul.f32.gmra.mxu0 %v299
        %v327 = vpop.f32.mrf.mxu0
        %v328 = vadd.f32 %v270, %v327
        %329 = vdwg.mxu0
        %330 = vmatpush.msra.mxu0 0.0
        %331 = vmatpush.msra.mxu0 0.0
        %332 = vmatpush.msra.mxu0 0.0
        %333 = vmatpush.msra.mxu0 0.0
        %334 = vmatpush.msra.mxu0 0.0
        %335 = vmatpush.msra.mxu0 0.0
        %336 = vmatpush.msra.mxu0 0.0
        %337 = vmatpush.msra.mxu0 0.0
        %338 = vmatpush.msra.mxu0 0.0
        %339 = vmatpush.msra.mxu0 0.0
        %340 = vmatpush.msra.mxu0 0.0
        %341 = vmatpush.msra.mxu0 0.0
        %342 = vmatpush.msra.mxu0 0.0
        %343 = vmatpush.msra.mxu0 0.0
        %344 = vmatpush.msra.mxu0 0.0
        %345 = vmatpush.msra.mxu0 %v305
        %346 = vmatmul.f32.gmra.mxu0 %v296
        %v347 = vpop.f32.mrf.mxu0
        %v348 = vadd.f32 %v290, %v347
        %349 = vmatmul.f32.gmra.mxu0 %v299
        %v350 = vpop.f32.mrf.mxu0
        %v351 = vadd.f32 %v293, %v350
        %352 = vdwg.mxu0
        %s353 = scalar_lea.vmem %s1, 32
        %v354 = vld [vmem:[%s353] sm:$0xff]
        %v355 = vld [vmem:[%s353 + $0x8] sm:$0xff]
        %356 = vst [vmem:[#allocation1] ss:$2 sm:$0xff] %v169
        %s357 = scalar_lea.vmem [#allocation1], 16
        %358 = vst [vmem:[%s357] ss:$2 sm:$0xff] %v170
        %v359 = vld.sshfl [vmem:[#allocation1] sm:$0xff pattern:$0x75316420]
        %v360 = vld.sshfl [vmem:[#allocation1 + $0x8] sm:$0xff pattern:$0x75316420]
        %v361 = vld.sshfl [vmem:[#allocation1 + $0x10] sm:$0xff pattern:$0x75316420]
        %362 = vrot.lane.b32.xlu0 %v359, 126
        %v363 = vpop.permute.xlu0 %362
        %364 = vrot.lane.b32.xlu0 %v360, 126
        %v365 = vpop.permute.xlu0 %364
        %366 = vrot.lane.b32.xlu0 %v361, 126
        %v367 = vpop.permute.xlu0 %366
        %vm368 = vcmask 1031168
        %v369 = vsel %vm368, %v363, %v365
        %v370 = vsel %vm368, %v365, %v367
        %v372 = vsel %vm235, %v354, 0
        %v375 = vsel %vm235, %v355, 0
        %v377 = vsel %vm242, %v369, 0
        %v379 = vsel %vm242, %v370, 0
        %381 = vmatpush.msra.mxu0 0.0
        %382 = vmatpush.msra.mxu0 0.0
        %383 = vmatpush.msra.mxu0 0.0
        %384 = vmatpush.msra.mxu0 0.0
        %385 = vmatpush.msra.mxu0 0.0
        %386 = vmatpush.msra.mxu0 0.0
        %387 = vmatpush.msra.mxu0 0.0
        %388 = vmatpush.msra.mxu0 0.0
        %389 = vmatpush.msra.mxu0 0.0
        %390 = vmatpush.msra.mxu0 0.0
        %391 = vmatpush.msra.mxu0 0.0
        %392 = vmatpush.msra.mxu0 0.0
        %393 = vmatpush.msra.mxu0 0.0
        %394 = vmatpush.msra.mxu0 0.0
        %395 = vmatpush.msra.mxu0 0.0
        %396 = vmatpush.msra.mxu0 %v377
        %397 = vmatmul.f32.gmra.mxu0 %v372
        %v398 = vpop.f32.mrf.mxu0
        %v399 = vadd.f32 0.0, %v398
        %400 = vmatmul.f32.gmra.mxu0 %v375
        %v401 = vpop.f32.mrf.mxu0
        %v402 = vadd.f32 0.0, %v401
        %403 = vdwg.mxu0
        %404 = vmatpush.msra.mxu0 0.0
        %405 = vmatpush.msra.mxu0 0.0
        %406 = vmatpush.msra.mxu0 0.0
        %407 = vmatpush.msra.mxu0 0.0
        %408 = vmatpush.msra.mxu0 0.0
        %409 = vmatpush.msra.mxu0 0.0
        %410 = vmatpush.msra.mxu0 0.0
        %411 = vmatpush.msra.mxu0 0.0
        %412 = vmatpush.msra.mxu0 0.0
        %413 = vmatpush.msra.mxu0 0.0
        %414 = vmatpush.msra.mxu0 0.0
        %415 = vmatpush.msra.mxu0 0.0
        %416 = vmatpush.msra.mxu0 0.0
        %417 = vmatpush.msra.mxu0 0.0
        %418 = vmatpush.msra.mxu0 0.0
        %419 = vmatpush.msra.mxu0 %v379
        %420 = vmatmul.f32.gmra.mxu0 %v372
        %v421 = vpop.f32.mrf.mxu0
        %v422 = vadd.f32 0.0, %v421
        %423 = vmatmul.f32.gmra.mxu0 %v375
        %v424 = vpop.f32.mrf.mxu0
        %v425 = vadd.f32 0.0, %v424
        %426 = vdwg.mxu0
        %v427 = vadd.f32 %v325, %v399
        %v428 = vadd.f32 %v348, %v422
        %v429 = vadd.f32 %v328, %v402
        %v430 = vadd.f32 %v351, %v425
        %vm431 = vcmp.lt.s32.totalorder %v196, 15
        %vm432 = vcmp.lt.s32.totalorder %v197, 15
        %433 = vst [vmem:[#allocation1] ss:$2 sm:$0xff] %v169
        %s434 = scalar_lea.vmem [#allocation1], 16
        %435 = vst [vmem:[%s434] ss:$2 sm:$0xff] %v170
        %v436 = vld.sshfl [vmem:[#allocation1] sm:$0xff pattern:$0x75316420]
        %v437 = vld.sshfl [vmem:[#allocation1 + $0x8] sm:$0xff pattern:$0x75316420]
        %v438 = vld.sshfl [vmem:[#allocation1 + $0x10] sm:$0xff pattern:$0x75316420]
        %439 = vrot.lane.b32.xlu0 %v436, 125
        %v440 = vpop.permute.xlu0 %439
        %441 = vrot.lane.b32.xlu0 %v437, 125
        %v442 = vpop.permute.xlu0 %441
        %443 = vrot.lane.b32.xlu0 %v438, 125
        %v444 = vpop.permute.xlu0 %443
        %vm445 = vcmask 1022976
        %v446 = vsel %vm445, %v440, %v442
        %v447 = vsel %vm445, %v442, %v444
        %v450 = vsel %vm431, %v446, 0.0
        %v451 = vsel %vm432, %v447, 0.0
        %s452 = scalar_lea.vmem %s1, 48
        %v453 = vld [vmem:[%s452] sm:$0xff]
        %v454 = vld [vmem:[%s452 + $0x8] sm:$0xff]
        %v456 = vsel %vm235, %v453, 0
        %v459 = vsel %vm235, %v454, 0
        %v462 = vsel %vm242, %v450, 0
        %v465 = vsel %vm242, %v451, 0
        %467 = vmatpush.msra.mxu0 0.0
        %468 = vmatpush.msra.mxu0 0.0
        %469 = vmatpush.msra.mxu0 0.0
        %470 = vmatpush.msra.mxu0 0.0
        %471 = vmatpush.msra.mxu0 0.0
        %472 = vmatpush.msra.mxu0 0.0
        %473 = vmatpush.msra.mxu0 0.0
        %474 = vmatpush.msra.mxu0 0.0
        %475 = vmatpush.msra.mxu0 0.0
        %476 = vmatpush.msra.mxu0 0.0
        %477 = vmatpush.msra.mxu0 0.0
        %478 = vmatpush.msra.mxu0 0.0
        %479 = vmatpush.msra.mxu0 0.0
        %480 = vmatpush.msra.mxu0 0.0
        %481 = vmatpush.msra.mxu0 0.0
        %482 = vmatpush.msra.mxu0 %v462
        %483 = vmatmul.f32.gmra.mxu0 %v456
        %v484 = vpop.f32.mrf.mxu0
        %v485 = vadd.f32 0.0, %v484
        %486 = vmatmul.f32.gmra.mxu0 %v459
        %v487 = vpop.f32.mrf.mxu0
        %v488 = vadd.f32 0.0, %v487
        %489 = vdwg.mxu0
        %490 = vmatpush.msra.mxu0 0.0
        %491 = vmatpush.msra.mxu0 0.0
        %492 = vmatpush.msra.mxu0 0.0
        %493 = vmatpush.msra.mxu0 0.0
        %494 = vmatpush.msra.mxu0 0.0
        %495 = vmatpush.msra.mxu0 0.0
        %496 = vmatpush.msra.mxu0 0.0
        %497 = vmatpush.msra.mxu0 0.0
        %498 = vmatpush.msra.mxu0 0.0
        %499 = vmatpush.msra.mxu0 0.0
        %500 = vmatpush.msra.mxu0 0.0
        %501 = vmatpush.msra.mxu0 0.0
        %502 = vmatpush.msra.mxu0 0.0
        %503 = vmatpush.msra.mxu0 0.0
        %504 = vmatpush.msra.mxu0 0.0
        %505 = vmatpush.msra.mxu0 %v465
        %506 = vmatmul.f32.gmra.mxu0 %v456
        %v507 = vpop.f32.mrf.mxu0
        %v508 = vadd.f32 0.0, %v507
        %509 = vmatmul.f32.gmra.mxu0 %v459
        %v510 = vpop.f32.mrf.mxu0
        %v511 = vadd.f32 0.0, %v510
        %512 = vdwg.mxu0
        %v513 = vadd.f32 %v427, %v485
        %v514 = vadd.f32 %v428, %v508
        %v515 = vadd.f32 %v429, %v488
        %v516 = vadd.f32 %v430, %v511
        %vm517 = vcmp.lt.s32.totalorder %v196, 14
        %vm518 = vcmp.lt.s32.totalorder %v197, 14
        %519 = vst [vmem:[#allocation1] ss:$2 sm:$0xff] %v169
        %s520 = scalar_lea.vmem [#allocation1], 16
        %521 = vst [vmem:[%s520] ss:$2 sm:$0xff] %v170
        %v522 = vld.sshfl [vmem:[#allocation1] sm:$0xff pattern:$0x75316420]
        %v523 = vld.sshfl [vmem:[#allocation1 + $0x8] sm:$0xff pattern:$0x75316420]
        %v524 = vld.sshfl [vmem:[#allocation1 + $0x10] sm:$0xff pattern:$0x75316420]
        %525 = vrot.lane.b32.xlu0 %v522, 124
        %v526 = vpop.permute.xlu0 %525
        %527 = vrot.lane.b32.xlu0 %v523, 124
        %v528 = vpop.permute.xlu0 %527
        %529 = vrot.lane.b32.xlu0 %v524, 124
        %v530 = vpop.permute.xlu0 %529
        %vm531 = vcmask 1014784
        %v532 = vsel %vm531, %v526, %v528
        %v533 = vsel %vm531, %v528, %v530
        %v536 = vsel %vm517, %v532, 0.0
        %v537 = vsel %vm518, %v533, 0.0
        %s538 = scalar_lea.vmem %s1, 64
        %v539 = vld [vmem:[%s538] sm:$0xff]
        %v540 = vld [vmem:[%s538 + $0x8] sm:$0xff]
        %v542 = vsel %vm235, %v539, 0
        %v545 = vsel %vm235, %v540, 0
        %v548 = vsel %vm242, %v536, 0
        %v551 = vsel %vm242, %v537, 0
        %553 = vmatpush.msra.mxu0 0.0
        %554 = vmatpush.msra.mxu0 0.0
        %555 = vmatpush.msra.mxu0 0.0
        %556 = vmatpush.msra.mxu0 0.0
        %557 = vmatpush.msra.mxu0 0.0
        %558 = vmatpush.msra.mxu0 0.0
        %559 = vmatpush.msra.mxu0 0.0
        %560 = vmatpush.msra.mxu0 0.0
        %561 = vmatpush.msra.mxu0 0.0
        %562 = vmatpush.msra.mxu0 0.0
        %563 = vmatpush.msra.mxu0 0.0
        %564 = vmatpush.msra.mxu0 0.0
        %565 = vmatpush.msra.mxu0 0.0
        %566 = vmatpush.msra.mxu0 0.0
        %567 = vmatpush.msra.mxu0 0.0
        %568 = vmatpush.msra.mxu0 %v548
        %569 = vmatmul.f32.gmra.mxu0 %v542
        %v570 = vpop.f32.mrf.mxu0
        %v571 = vadd.f32 0.0, %v570
        %572 = vmatmul.f32.gmra.mxu0 %v545
        %v573 = vpop.f32.mrf.mxu0
        %v574 = vadd.f32 0.0, %v573
        %575 = vdwg.mxu0
        %576 = vmatpush.msra.mxu0 0.0
        %577 = vmatpush.msra.mxu0 0.0
        %578 = vmatpush.msra.mxu0 0.0
        %579 = vmatpush.msra.mxu0 0.0
        %580 = vmatpush.msra.mxu0 0.0
        %581 = vmatpush.msra.mxu0 0.0
        %582 = vmatpush.msra.mxu0 0.0
        %583 = vmatpush.msra.mxu0 0.0
        %584 = vmatpush.msra.mxu0 0.0
        %585 = vmatpush.msra.mxu0 0.0
        %586 = vmatpush.msra.mxu0 0.0
        %587 = vmatpush.msra.mxu0 0.0
        %588 = vmatpush.msra.mxu0 0.0
        %589 = vmatpush.msra.mxu0 0.0
        %590 = vmatpush.msra.mxu0 0.0
        %591 = vmatpush.msra.mxu0 %v551
        %592 = vmatmul.f32.gmra.mxu0 %v542
        %v593 = vpop.f32.mrf.mxu0
        %v594 = vadd.f32 0.0, %v593
        %595 = vmatmul.f32.gmra.mxu0 %v545
        %v596 = vpop.f32.mrf.mxu0
        %v597 = vadd.f32 0.0, %v596
        %598 = vdwg.mxu0
        %v599 = vadd.f32 %v513, %v571
        %v600 = vadd.f32 %v514, %v594
        %v601 = vadd.f32 %v515, %v574
        %v602 = vadd.f32 %v516, %v597
        %603 = vst [vmem:[#allocation1] ss:$2 sm:$0xff] %v169
        %s604 = scalar_lea.vmem [#allocation1], 16
        %605 = vst [vmem:[%s604] ss:$2 sm:$0xff] %v170
        %v606 = vld.sshfl [vmem:[#allocation1] sm:$0xff pattern:$0x75316420]
        %v607 = vld.sshfl [vmem:[#allocation1 + $0x8] sm:$0xff pattern:$0x75316420]
        %v608 = vld.sshfl [vmem:[#allocation1 + $0x10] sm:$0xff pattern:$0x75316420]
        %609 = vrot.lane.b32.xlu0 %v606, 112
        %v610 = vpop.permute.xlu0 %609
        %611 = vrot.lane.b32.xlu0 %v607, 112
        %v612 = vpop.permute.xlu0 %611
        %613 = vrot.lane.b32.xlu0 %v608, 112
        %v614 = vpop.permute.xlu0 %613
        %vm615 = vcmask 916480
        %v616 = vsel %vm615, %v610, %v612
        %v617 = vsel %vm615, %v612, %v614
        %v620 = vsel %vm198, %v616, 0.0
        %v621 = vsel %vm199, %v617, 0.0
        %s622 = scalar_lea.vmem %s1, 80
        %v623 = vld [vmem:[%s622] sm:$0xff]
        %v624 = vld [vmem:[%s622 + $0x8] sm:$0xff]
        %v626 = vsel %vm235, %v623, 0
        %v629 = vsel %vm235, %v624, 0
        %v632 = vsel %vm242, %v620, 0
        %v635 = vsel %vm242, %v621, 0
        %637 = vmatpush.msra.mxu0 0.0
        %638 = vmatpush.msra.mxu0 0.0
        %639 = vmatpush.msra.mxu0 0.0
        %640 = vmatpush.msra.mxu0 0.0
        %641 = vmatpush.msra.mxu0 0.0
        %642 = vmatpush.msra.mxu0 0.0
        %643 = vmatpush.msra.mxu0 0.0
        %644 = vmatpush.msra.mxu0 0.0
        %645 = vmatpush.msra.mxu0 0.0
        %646 = vmatpush.msra.mxu0 0.0
        %647 = vmatpush.msra.mxu0 0.0
        %648 = vmatpush.msra.mxu0 0.0
        %649 = vmatpush.msra.mxu0 0.0
        %650 = vmatpush.msra.mxu0 0.0
        %651 = vmatpush.msra.mxu0 0.0
        %652 = vmatpush.msra.mxu0 %v632
        %653 = vmatmul.f32.gmra.mxu0 %v626
        %v654 = vpop.f32.mrf.mxu0
        %v655 = vadd.f32 0.0, %v654
        %656 = vmatmul.f32.gmra.mxu0 %v629
        %v657 = vpop.f32.mrf.mxu0
        %v658 = vadd.f32 0.0, %v657
        %659 = vdwg.mxu0
        %660 = vmatpush.msra.mxu0 0.0
        %661 = vmatpush.msra.mxu0 0.0
        %662 = vmatpush.msra.mxu0 0.0
        %663 = vmatpush.msra.mxu0 0.0
        %664 = vmatpush.msra.mxu0 0.0
        %665 = vmatpush.msra.mxu0 0.0
        %666 = vmatpush.msra.mxu0 0.0
        %667 = vmatpush.msra.mxu0 0.0
        %668 = vmatpush.msra.mxu0 0.0
        %669 = vmatpush.msra.mxu0 0.0
        %670 = vmatpush.msra.mxu0 0.0
        %671 = vmatpush.msra.mxu0 0.0
        %672 = vmatpush.msra.mxu0 0.0
        %673 = vmatpush.msra.mxu0 0.0
        %674 = vmatpush.msra.mxu0 0.0
        %675 = vmatpush.msra.mxu0 %v635
        %676 = vmatmul.f32.gmra.mxu0 %v626
        %v677 = vpop.f32.mrf.mxu0
        %v678 = vadd.f32 0.0, %v677
        %679 = vmatmul.f32.gmra.mxu0 %v629
        %v680 = vpop.f32.mrf.mxu0
        %v681 = vadd.f32 0.0, %v680
        %682 = vdwg.mxu0
        %v683 = vadd.f32 %v599, %v655
        %v684 = vadd.f32 %v600, %v678
        %v685 = vadd.f32 %v601, %v658
        %v686 = vadd.f32 %v602, %v681
        %687 = vst [vmem:[#allocation1] ss:$2 sm:$0xff] %v169
        %s688 = scalar_lea.vmem [#allocation1], 16
        %689 = vst [vmem:[%s688] ss:$2 sm:$0xff] %v170
        %v690 = vld.sshfl [vmem:[#allocation1] sm:$0xff pattern:$0x75316420]
        %v691 = vld.sshfl [vmem:[#allocation1 + $0x8] sm:$0xff pattern:$0x75316420]
        %v692 = vld.sshfl [vmem:[#allocation1 + $0x10] sm:$0xff pattern:$0x75316420]
        %693 = vrot.lane.b32.xlu0 %v690, 111
        %v694 = vpop.permute.xlu0 %693
        %695 = vrot.lane.b32.xlu0 %v691, 111
        %v696 = vpop.permute.xlu0 %695
        %697 = vrot.lane.b32.xlu0 %v692, 111
        %v698 = vpop.permute.xlu0 %697
        %vm699 = vcmask 908288
        %v700 = vsel %vm699, %v694, %v696
        %v701 = vsel %vm699, %v696, %v698
        %v704 = vsel %vm210, %v700, 0.0
        %v705 = vsel %vm211, %v701, 0.0
        %s706 = scalar_lea.vmem %s1, 96
        %v707 = vld [vmem:[%s706] sm:$0xff]
        %v708 = vld [vmem:[%s706 + $0x8] sm:$0xff]
        %v710 = vsel %vm235, %v707, 0
        %v713 = vsel %vm235, %v708, 0
        %v716 = vsel %vm242, %v704, 0
        %v719 = vsel %vm242, %v705, 0
        %721 = vmatpush.msra.mxu0 0.0
        %722 = vmatpush.msra.mxu0 0.0
        %723 = vmatpush.msra.mxu0 0.0
        %724 = vmatpush.msra.mxu0 0.0
        %725 = vmatpush.msra.mxu0 0.0
        %726 = vmatpush.msra.mxu0 0.0
        %727 = vmatpush.msra.mxu0 0.0
        %728 = vmatpush.msra.mxu0 0.0
        %729 = vmatpush.msra.mxu0 0.0
        %730 = vmatpush.msra.mxu0 0.0
        %731 = vmatpush.msra.mxu0 0.0
        %732 = vmatpush.msra.mxu0 0.0
        %733 = vmatpush.msra.mxu0 0.0
        %734 = vmatpush.msra.mxu0 0.0
        %735 = vmatpush.msra.mxu0 0.0
        %736 = vmatpush.msra.mxu0 %v716
        %737 = vmatmul.f32.gmra.mxu0 %v710
        %v738 = vpop.f32.mrf.mxu0
        %v739 = vadd.f32 0.0, %v738
        %740 = vmatmul.f32.gmra.mxu0 %v713
        %v741 = vpop.f32.mrf.mxu0
        %v742 = vadd.f32 0.0, %v741
        %743 = vdwg.mxu0
        %744 = vmatpush.msra.mxu0 0.0
        %745 = vmatpush.msra.mxu0 0.0
        %746 = vmatpush.msra.mxu0 0.0
        %747 = vmatpush.msra.mxu0 0.0
        %748 = vmatpush.msra.mxu0 0.0
        %749 = vmatpush.msra.mxu0 0.0
        %750 = vmatpush.msra.mxu0 0.0
        %751 = vmatpush.msra.mxu0 0.0
        %752 = vmatpush.msra.mxu0 0.0
        %753 = vmatpush.msra.mxu0 0.0
        %754 = vmatpush.msra.mxu0 0.0
        %755 = vmatpush.msra.mxu0 0.0
        %756 = vmatpush.msra.mxu0 0.0
        %757 = vmatpush.msra.mxu0 0.0
        %758 = vmatpush.msra.mxu0 0.0
        %759 = vmatpush.msra.mxu0 %v719
        %760 = vmatmul.f32.gmra.mxu0 %v710
        %v761 = vpop.f32.mrf.mxu0
        %v762 = vadd.f32 0.0, %v761
        %763 = vmatmul.f32.gmra.mxu0 %v713
        %v764 = vpop.f32.mrf.mxu0
        %v765 = vadd.f32 0.0, %v764
        %766 = vdwg.mxu0
        %v767 = vadd.f32 %v683, %v739
        %v768 = vadd.f32 %v684, %v762
        %v769 = vadd.f32 %v685, %v742
        %v770 = vadd.f32 %v686, %v765
        %s771 = scalar_lea.vmem %s1, 112
        %v772 = vld [vmem:[%s771] sm:$0xff]
        %v773 = vld [vmem:[%s771 + $0x8] sm:$0xff]
        %774 = vst [vmem:[#allocation1] ss:$2 sm:$0xff] %v169
        %s775 = scalar_lea.vmem [#allocation1], 16
        %776 = vst [vmem:[%s775] ss:$2 sm:$0xff] %v170
        %v777 = vld.sshfl [vmem:[#allocation1] sm:$0xff pattern:$0x75316420]
        %v778 = vld.sshfl [vmem:[#allocation1 + $0x8] sm:$0xff pattern:$0x75316420]
        %v779 = vld.sshfl [vmem:[#allocation1 + $0x10] sm:$0xff pattern:$0x75316420]
        %780 = vrot.lane.b32.xlu0 %v777, 110
        %v781 = vpop.permute.xlu0 %780
        %782 = vrot.lane.b32.xlu0 %v778, 110
        %v783 = vpop.permute.xlu0 %782
        %784 = vrot.lane.b32.xlu0 %v779, 110
        %v785 = vpop.permute.xlu0 %784
        %vm786 = vcmask 900096
        %v787 = vsel %vm786, %v781, %v783
        %v788 = vsel %vm786, %v783, %v785
        %v790 = vsel %vm235, %v772, 0
        %v793 = vsel %vm235, %v773, 0
        %v795 = vsel %vm242, %v787, 0
        %v797 = vsel %vm242, %v788, 0
        %799 = vmatpush.msra.mxu0 0.0
        %800 = vmatpush.msra.mxu0 0.0
        %801 = vmatpush.msra.mxu0 0.0
        %802 = vmatpush.msra.mxu0 0.0
        %803 = vmatpush.msra.mxu0 0.0
        %804 = vmatpush.msra.mxu0 0.0
        %805 = vmatpush.msra.mxu0 0.0
        %806 = vmatpush.msra.mxu0 0.0
        %807 = vmatpush.msra.mxu0 0.0
        %808 = vmatpush.msra.mxu0 0.0
        %809 = vmatpush.msra.mxu0 0.0
        %810 = vmatpush.msra.mxu0 0.0
        %811 = vmatpush.msra.mxu0 0.0
        %812 = vmatpush.msra.mxu0 0.0
        %813 = vmatpush.msra.mxu0 0.0
        %814 = vmatpush.msra.mxu0 %v795
        %815 = vmatmul.f32.gmra.mxu0 %v790
        %v816 = vpop.f32.mrf.mxu0
        %v817 = vadd.f32 0.0, %v816
        %818 = vmatmul.f32.gmra.mxu0 %v793
        %v819 = vpop.f32.mrf.mxu0
        %v820 = vadd.f32 0.0, %v819
        %821 = vdwg.mxu0
        %822 = vmatpush.msra.mxu0 0.0
        %823 = vmatpush.msra.mxu0 0.0
        %824 = vmatpush.msra.mxu0 0.0
        %825 = vmatpush.msra.mxu0 0.0
        %826 = vmatpush.msra.mxu0 0.0
        %827 = vmatpush.msra.mxu0 0.0
        %828 = vmatpush.msra.mxu0 0.0
        %829 = vmatpush.msra.mxu0 0.0
        %830 = vmatpush.msra.mxu0 0.0
        %831 = vmatpush.msra.mxu0 0.0
        %832 = vmatpush.msra.mxu0 0.0
        %833 = vmatpush.msra.mxu0 0.0
        %834 = vmatpush.msra.mxu0 0.0
        %835 = vmatpush.msra.mxu0 0.0
        %836 = vmatpush.msra.mxu0 0.0
        %837 = vmatpush.msra.mxu0 %v797
        %838 = vmatmul.f32.gmra.mxu0 %v790
        %v839 = vpop.f32.mrf.mxu0
        %v840 = vadd.f32 0.0, %v839
        %841 = vmatmul.f32.gmra.mxu0 %v793
        %v842 = vpop.f32.mrf.mxu0
        %v843 = vadd.f32 0.0, %v842
        %844 = vdwg.mxu0
        %v845 = vadd.f32 %v767, %v817
        %v846 = vadd.f32 %v768, %v840
        %v847 = vadd.f32 %v769, %v820
        %v848 = vadd.f32 %v770, %v843
        %849 = vst [vmem:[#allocation1] ss:$2 sm:$0xff] %v169
        %s850 = scalar_lea.vmem [#allocation1], 16
        %851 = vst [vmem:[%s850] ss:$2 sm:$0xff] %v170
        %v852 = vld.sshfl [vmem:[#allocation1] sm:$0xff pattern:$0x75316420]
        %v853 = vld.sshfl [vmem:[#allocation1 + $0x8] sm:$0xff pattern:$0x75316420]
        %v854 = vld.sshfl [vmem:[#allocation1 + $0x10] sm:$0xff pattern:$0x75316420]
        %855 = vrot.lane.b32.xlu0 %v852, 109
        %v856 = vpop.permute.xlu0 %855
        %857 = vrot.lane.b32.xlu0 %v853, 109
        %v858 = vpop.permute.xlu0 %857
        %859 = vrot.lane.b32.xlu0 %v854, 109
        %v860 = vpop.permute.xlu0 %859
        %vm861 = vcmask 891904
        %v862 = vsel %vm861, %v856, %v858
        %v863 = vsel %vm861, %v858, %v860
        %v866 = vsel %vm431, %v862, 0.0
        %v867 = vsel %vm432, %v863, 0.0
        %s868 = scalar_lea.vmem %s1, 128
        %v869 = vld [vmem:[%s868] sm:$0xff]
        %v870 = vld [vmem:[%s868 + $0x8] sm:$0xff]
        %v872 = vsel %vm235, %v869, 0
        %v875 = vsel %vm235, %v870, 0
        %v878 = vsel %vm242, %v866, 0
        %v881 = vsel %vm242, %v867, 0
        %883 = vmatpush.msra.mxu0 0.0
        %884 = vmatpush.msra.mxu0 0.0
        %885 = vmatpush.msra.mxu0 0.0
        %886 = vmatpush.msra.mxu0 0.0
        %887 = vmatpush.msra.mxu0 0.0
        %888 = vmatpush.msra.mxu0 0.0
        %889 = vmatpush.msra.mxu0 0.0
        %890 = vmatpush.msra.mxu0 0.0
        %891 = vmatpush.msra.mxu0 0.0
        %892 = vmatpush.msra.mxu0 0.0
        %893 = vmatpush.msra.mxu0 0.0
        %894 = vmatpush.msra.mxu0 0.0
        %895 = vmatpush.msra.mxu0 0.0
        %896 = vmatpush.msra.mxu0 0.0
        %897 = vmatpush.msra.mxu0 0.0
        %898 = vmatpush.msra.mxu0 %v878
        %899 = vmatmul.f32.gmra.mxu0 %v872
        %v900 = vpop.f32.mrf.mxu0
        %v901 = vadd.f32 0.0, %v900
        %902 = vmatmul.f32.gmra.mxu0 %v875
        %v903 = vpop.f32.mrf.mxu0
        %v904 = vadd.f32 0.0, %v903
        %905 = vdwg.mxu0
        %906 = vmatpush.msra.mxu0 0.0
        %907 = vmatpush.msra.mxu0 0.0
        %908 = vmatpush.msra.mxu0 0.0
        %909 = vmatpush.msra.mxu0 0.0
        %910 = vmatpush.msra.mxu0 0.0
        %911 = vmatpush.msra.mxu0 0.0
        %912 = vmatpush.msra.mxu0 0.0
        %913 = vmatpush.msra.mxu0 0.0
        %914 = vmatpush.msra.mxu0 0.0
        %915 = vmatpush.msra.mxu0 0.0
        %916 = vmatpush.msra.mxu0 0.0
        %917 = vmatpush.msra.mxu0 0.0
        %918 = vmatpush.msra.mxu0 0.0
        %919 = vmatpush.msra.mxu0 0.0
        %920 = vmatpush.msra.mxu0 0.0
        %921 = vmatpush.msra.mxu0 %v881
        %922 = vmatmul.f32.gmra.mxu0 %v872
        %v923 = vpop.f32.mrf.mxu0
        %v924 = vadd.f32 0.0, %v923
        %925 = vmatmul.f32.gmra.mxu0 %v875
        %v926 = vpop.f32.mrf.mxu0
        %v927 = vadd.f32 0.0, %v926
        %928 = vdwg.mxu0
        %v929 = vadd.f32 %v845, %v901
        %v930 = vadd.f32 %v846, %v924
        %v931 = vadd.f32 %v847, %v904
        %v932 = vadd.f32 %v848, %v927
        %933 = vst [vmem:[#allocation1] ss:$2 sm:$0xff] %v169
        %s934 = scalar_lea.vmem [#allocation1], 16
        %935 = vst [vmem:[%s934] ss:$2 sm:$0xff] %v170
        %v936 = vld.sshfl [vmem:[#allocation1] sm:$0xff pattern:$0x75316420]
        %v937 = vld.sshfl [vmem:[#allocation1 + $0x8] sm:$0xff pattern:$0x75316420]
        %v938 = vld.sshfl [vmem:[#allocation1 + $0x10] sm:$0xff pattern:$0x75316420]
        %939 = vrot.lane.b32.xlu0 %v936, 108
        %v940 = vpop.permute.xlu0 %939
        %941 = vrot.lane.b32.xlu0 %v937, 108
        %v942 = vpop.permute.xlu0 %941
        %943 = vrot.lane.b32.xlu0 %v938, 108
        %v944 = vpop.permute.xlu0 %943
        %vm945 = vcmask 883712
        %v946 = vsel %vm945, %v940, %v942
        %v947 = vsel %vm945, %v942, %v944
        %v950 = vsel %vm517, %v946, 0.0
        %v951 = vsel %vm518, %v947, 0.0
        %s952 = scalar_lea.vmem %s1, 144
        %v953 = vld [vmem:[%s952] sm:$0xff]
        %v954 = vld [vmem:[%s952 + $0x8] sm:$0xff]
        %v956 = vsel %vm235, %v953, 0
        %v959 = vsel %vm235, %v954, 0
        %v962 = vsel %vm242, %v950, 0
        %v965 = vsel %vm242, %v951, 0
        %967 = vmatpush.msra.mxu0 0.0
        %968 = vmatpush.msra.mxu0 0.0
        %969 = vmatpush.msra.mxu0 0.0
        %970 = vmatpush.msra.mxu0 0.0
        %971 = vmatpush.msra.mxu0 0.0
        %972 = vmatpush.msra.mxu0 0.0
        %973 = vmatpush.msra.mxu0 0.0
        %974 = vmatpush.msra.mxu0 0.0
        %975 = vmatpush.msra.mxu0 0.0
        %976 = vmatpush.msra.mxu0 0.0
        %977 = vmatpush.msra.mxu0 0.0
        %978 = vmatpush.msra.mxu0 0.0
        %979 = vmatpush.msra.mxu0 0.0
        %980 = vmatpush.msra.mxu0 0.0
        %981 = vmatpush.msra.mxu0 0.0
        %982 = vmatpush.msra.mxu0 %v962
        %983 = vmatmul.f32.gmra.mxu0 %v956
        %v984 = vpop.f32.mrf.mxu0
        %v985 = vadd.f32 0.0, %v984
        %986 = vmatmul.f32.gmra.mxu0 %v959
        %v987 = vpop.f32.mrf.mxu0
        %v988 = vadd.f32 0.0, %v987
        %989 = vdwg.mxu0
        %990 = vmatpush.msra.mxu0 0.0
        %991 = vmatpush.msra.mxu0 0.0
        %992 = vmatpush.msra.mxu0 0.0
        %993 = vmatpush.msra.mxu0 0.0
        %994 = vmatpush.msra.mxu0 0.0
        %995 = vmatpush.msra.mxu0 0.0
        %996 = vmatpush.msra.mxu0 0.0
        %997 = vmatpush.msra.mxu0 0.0
        %998 = vmatpush.msra.mxu0 0.0
        %999 = vmatpush.msra.mxu0 0.0
        %1000 = vmatpush.msra.mxu0 0.0
        %1001 = vmatpush.msra.mxu0 0.0
        %1002 = vmatpush.msra.mxu0 0.0
        %1003 = vmatpush.msra.mxu0 0.0
        %1004 = vmatpush.msra.mxu0 0.0
        %1005 = vmatpush.msra.mxu0 %v965
        %1006 = vmatmul.f32.gmra.mxu0 %v956
        %v1007 = vpop.f32.mrf.mxu0
        %v1008 = vadd.f32 0.0, %v1007
        %1009 = vmatmul.f32.gmra.mxu0 %v959
        %v1010 = vpop.f32.mrf.mxu0
        %v1011 = vadd.f32 0.0, %v1010
        %1012 = vdwg.mxu0
        %v1013 = vadd.f32 %v929, %v985
        %v1014 = vadd.f32 %v930, %v1008
        %v1015 = vadd.f32 %v931, %v988
        %v1016 = vadd.f32 %v932, %v1011
        %1017 = vst [vmem:[#allocation1] ss:$2 sm:$0xff] %v169
        %s1018 = scalar_lea.vmem [#allocation1], 16
        %1019 = vst [vmem:[%s1018] ss:$2 sm:$0xff] %v170
        %v1020 = vld.sshfl [vmem:[#allocation1] sm:$0xff pattern:$0x75316420]
        %v1021 = vld.sshfl [vmem:[#allocation1 + $0x8] sm:$0xff pattern:$0x75316420]
        %v1022 = vld.sshfl [vmem:[#allocation1 + $0x10] sm:$0xff pattern:$0x75316420]
        %1023 = vrot.lane.b32.xlu0 %v1020, 96
        %v1024 = vpop.permute.xlu0 %1023
        %1025 = vrot.lane.b32.xlu0 %v1021, 96
        %v1026 = vpop.permute.xlu0 %1025
        %1027 = vrot.lane.b32.xlu0 %v1022, 96
        %v1028 = vpop.permute.xlu0 %1027
        %vm1029 = vcmask 785408
        %v1030 = vsel %vm1029, %v1024, %v1026
        %v1031 = vsel %vm1029, %v1026, %v1028
        %v1034 = vsel %vm198, %v1030, 0.0
        %v1035 = vsel %vm199, %v1031, 0.0
        %s1036 = scalar_lea.vmem %s1, 160
        %v1037 = vld [vmem:[%s1036] sm:$0xff]
        %v1038 = vld [vmem:[%s1036 + $0x8] sm:$0xff]
        %v1040 = vsel %vm235, %v1037, 0
        %v1043 = vsel %vm235, %v1038, 0
        %v1046 = vsel %vm242, %v1034, 0
        %v1049 = vsel %vm242, %v1035, 0
        %1051 = vmatpush.msra.mxu0 0.0
        %1052 = vmatpush.msra.mxu0 0.0
        %1053 = vmatpush.msra.mxu0 0.0
        %1054 = vmatpush.msra.mxu0 0.0
        %1055 = vmatpush.msra.mxu0 0.0
        %1056 = vmatpush.msra.mxu0 0.0
        %1057 = vmatpush.msra.mxu0 0.0
        %1058 = vmatpush.msra.mxu0 0.0
        %1059 = vmatpush.msra.mxu0 0.0
        %1060 = vmatpush.msra.mxu0 0.0
        %1061 = vmatpush.msra.mxu0 0.0
        %1062 = vmatpush.msra.mxu0 0.0
        %1063 = vmatpush.msra.mxu0 0.0
        %1064 = vmatpush.msra.mxu0 0.0
        %1065 = vmatpush.msra.mxu0 0.0
        %1066 = vmatpush.msra.mxu0 %v1046
        %1067 = vmatmul.f32.gmra.mxu0 %v1040
        %v1068 = vpop.f32.mrf.mxu0
        %v1069 = vadd.f32 0.0, %v1068
        %1070 = vmatmul.f32.gmra.mxu0 %v1043
        %v1071 = vpop.f32.mrf.mxu0
        %v1072 = vadd.f32 0.0, %v1071
        %1073 = vdwg.mxu0
        %1074 = vmatpush.msra.mxu0 0.0
        %1075 = vmatpush.msra.mxu0 0.0
        %1076 = vmatpush.msra.mxu0 0.0
        %1077 = vmatpush.msra.mxu0 0.0
        %1078 = vmatpush.msra.mxu0 0.0
        %1079 = vmatpush.msra.mxu0 0.0
        %1080 = vmatpush.msra.mxu0 0.0
        %1081 = vmatpush.msra.mxu0 0.0
        %1082 = vmatpush.msra.mxu0 0.0
        %1083 = vmatpush.msra.mxu0 0.0
        %1084 = vmatpush.msra.mxu0 0.0
        %1085 = vmatpush.msra.mxu0 0.0
        %1086 = vmatpush.msra.mxu0 0.0
        %1087 = vmatpush.msra.mxu0 0.0
        %1088 = vmatpush.msra.mxu0 0.0
        %1089 = vmatpush.msra.mxu0 %v1049
        %1090 = vmatmul.f32.gmra.mxu0 %v1040
        %v1091 = vpop.f32.mrf.mxu0
        %v1092 = vadd.f32 0.0, %v1091
        %1093 = vmatmul.f32.gmra.mxu0 %v1043
        %v1094 = vpop.f32.mrf.mxu0
        %v1095 = vadd.f32 0.0, %v1094
        %1096 = vdwg.mxu0
        %v1097 = vadd.f32 %v1013, %v1069
        %v1098 = vadd.f32 %v1014, %v1092
        %v1099 = vadd.f32 %v1015, %v1072
        %v1100 = vadd.f32 %v1016, %v1095
        %1101 = vst [vmem:[#allocation1] ss:$2 sm:$0xff] %v169
        %s1102 = scalar_lea.vmem [#allocation1], 16
        %1103 = vst [vmem:[%s1102] ss:$2 sm:$0xff] %v170
        %v1104 = vld.sshfl [vmem:[#allocation1] sm:$0xff pattern:$0x75316420]
        %v1105 = vld.sshfl [vmem:[#allocation1 + $0x8] sm:$0xff pattern:$0x75316420]
        %v1106 = vld.sshfl [vmem:[#allocation1 + $0x10] sm:$0xff pattern:$0x75316420]
        %1107 = vrot.lane.b32.xlu0 %v1104, 95
        %v1108 = vpop.permute.xlu0 %1107
        %1109 = vrot.lane.b32.xlu0 %v1105, 95
        %v1110 = vpop.permute.xlu0 %1109
        %1111 = vrot.lane.b32.xlu0 %v1106, 95
        %v1112 = vpop.permute.xlu0 %1111
        %vm1113 = vcmask 777216
        %v1114 = vsel %vm1113, %v1108, %v1110
        %v1115 = vsel %vm1113, %v1110, %v1112
        %v1118 = vsel %vm210, %v1114, 0.0
        %v1119 = vsel %vm211, %v1115, 0.0
        %s1120 = scalar_lea.vmem %s1, 176
        %v1121 = vld [vmem:[%s1120] sm:$0xff]
        %v1122 = vld [vmem:[%s1120 + $0x8] sm:$0xff]
        %v1124 = vsel %vm235, %v1121, 0
        %v1127 = vsel %vm235, %v1122, 0
        %v1130 = vsel %vm242, %v1118, 0
        %v1133 = vsel %vm242, %v1119, 0
        %1135 = vmatpush.msra.mxu0 0.0
        %1136 = vmatpush.msra.mxu0 0.0
        %1137 = vmatpush.msra.mxu0 0.0
        %1138 = vmatpush.msra.mxu0 0.0
        %1139 = vmatpush.msra.mxu0 0.0
        %1140 = vmatpush.msra.mxu0 0.0
        %1141 = vmatpush.msra.mxu0 0.0
        %1142 = vmatpush.msra.mxu0 0.0
        %1143 = vmatpush.msra.mxu0 0.0
        %1144 = vmatpush.msra.mxu0 0.0
        %1145 = vmatpush.msra.mxu0 0.0
        %1146 = vmatpush.msra.mxu0 0.0
        %1147 = vmatpush.msra.mxu0 0.0
        %1148 = vmatpush.msra.mxu0 0.0
        %1149 = vmatpush.msra.mxu0 0.0
        %1150 = vmatpush.msra.mxu0 %v1130
        %1151 = vmatmul.f32.gmra.mxu0 %v1124
        %v1152 = vpop.f32.mrf.mxu0
        %v1153 = vadd.f32 0.0, %v1152
        %1154 = vmatmul.f32.gmra.mxu0 %v1127
        %v1155 = vpop.f32.mrf.mxu0
        %v1156 = vadd.f32 0.0, %v1155
        %1157 = vdwg.mxu0
        %1158 = vmatpush.msra.mxu0 0.0
        %1159 = vmatpush.msra.mxu0 0.0
        %1160 = vmatpush.msra.mxu0 0.0
        %1161 = vmatpush.msra.mxu0 0.0
        %1162 = vmatpush.msra.mxu0 0.0
        %1163 = vmatpush.msra.mxu0 0.0
        %1164 = vmatpush.msra.mxu0 0.0
        %1165 = vmatpush.msra.mxu0 0.0
        %1166 = vmatpush.msra.mxu0 0.0
        %1167 = vmatpush.msra.mxu0 0.0
        %1168 = vmatpush.msra.mxu0 0.0
        %1169 = vmatpush.msra.mxu0 0.0
        %1170 = vmatpush.msra.mxu0 0.0
        %1171 = vmatpush.msra.mxu0 0.0
        %1172 = vmatpush.msra.mxu0 0.0
        %1173 = vmatpush.msra.mxu0 %v1133
        %1174 = vmatmul.f32.gmra.mxu0 %v1124
        %v1175 = vpop.f32.mrf.mxu0
        %v1176 = vadd.f32 0.0, %v1175
        %1177 = vmatmul.f32.gmra.mxu0 %v1127
        %v1178 = vpop.f32.mrf.mxu0
        %v1179 = vadd.f32 0.0, %v1178
        %1180 = vdwg.mxu0
        %v1181 = vadd.f32 %v1097, %v1153
        %v1182 = vadd.f32 %v1098, %v1176
        %v1183 = vadd.f32 %v1099, %v1156
        %v1184 = vadd.f32 %v1100, %v1179
        %s1185 = scalar_lea.vmem %s1, 192
        %v1186 = vld [vmem:[%s1185] sm:$0xff]
        %v1187 = vld [vmem:[%s1185 + $0x8] sm:$0xff]
        %1188 = vst [vmem:[#allocation1] ss:$2 sm:$0xff] %v169
        %s1189 = scalar_lea.vmem [#allocation1], 16
        %1190 = vst [vmem:[%s1189] ss:$2 sm:$0xff] %v170
        %v1191 = vld.sshfl [vmem:[#allocation1] sm:$0xff pattern:$0x75316420]
        %v1192 = vld.sshfl [vmem:[#allocation1 + $0x8] sm:$0xff pattern:$0x75316420]
        %v1193 = vld.sshfl [vmem:[#allocation1 + $0x10] sm:$0xff pattern:$0x75316420]
        %1194 = vrot.lane.b32.xlu0 %v1191, 94
        %v1195 = vpop.permute.xlu0 %1194
        %1196 = vrot.lane.b32.xlu0 %v1192, 94
        %v1197 = vpop.permute.xlu0 %1196
        %1198 = vrot.lane.b32.xlu0 %v1193, 94
        %v1199 = vpop.permute.xlu0 %1198
        %vm1200 = vcmask 769024
        %v1201 = vsel %vm1200, %v1195, %v1197
        %v1202 = vsel %vm1200, %v1197, %v1199
        %v1204 = vsel %vm235, %v1186, 0
        %v1207 = vsel %vm235, %v1187, 0
        %v1209 = vsel %vm242, %v1201, 0
        %v1211 = vsel %vm242, %v1202, 0
        %1213 = vmatpush.msra.mxu0 0.0
        %1214 = vmatpush.msra.mxu0 0.0
        %1215 = vmatpush.msra.mxu0 0.0
        %1216 = vmatpush.msra.mxu0 0.0
        %1217 = vmatpush.msra.mxu0 0.0
        %1218 = vmatpush.msra.mxu0 0.0
        %1219 = vmatpush.msra.mxu0 0.0
        %1220 = vmatpush.msra.mxu0 0.0
        %1221 = vmatpush.msra.mxu0 0.0
        %1222 = vmatpush.msra.mxu0 0.0
        %1223 = vmatpush.msra.mxu0 0.0
        %1224 = vmatpush.msra.mxu0 0.0
        %1225 = vmatpush.msra.mxu0 0.0
        %1226 = vmatpush.msra.mxu0 0.0
        %1227 = vmatpush.msra.mxu0 0.0
        %1228 = vmatpush.msra.mxu0 %v1209
        %1229 = vmatmul.f32.gmra.mxu0 %v1204
        %v1230 = vpop.f32.mrf.mxu0
        %v1231 = vadd.f32 0.0, %v1230
        %1232 = vmatmul.f32.gmra.mxu0 %v1207
        %v1233 = vpop.f32.mrf.mxu0
        %v1234 = vadd.f32 0.0, %v1233
        %1235 = vdwg.mxu0
        %1236 = vmatpush.msra.mxu0 0.0
        %1237 = vmatpush.msra.mxu0 0.0
        %1238 = vmatpush.msra.mxu0 0.0
        %1239 = vmatpush.msra.mxu0 0.0
        %1240 = vmatpush.msra.mxu0 0.0
        %1241 = vmatpush.msra.mxu0 0.0
        %1242 = vmatpush.msra.mxu0 0.0
        %1243 = vmatpush.msra.mxu0 0.0
        %1244 = vmatpush.msra.mxu0 0.0
        %1245 = vmatpush.msra.mxu0 0.0
        %1246 = vmatpush.msra.mxu0 0.0
        %1247 = vmatpush.msra.mxu0 0.0
        %1248 = vmatpush.msra.mxu0 0.0
        %1249 = vmatpush.msra.mxu0 0.0
        %1250 = vmatpush.msra.mxu0 0.0
        %1251 = vmatpush.msra.mxu0 %v1211
        %1252 = vmatmul.f32.gmra.mxu0 %v1204
        %v1253 = vpop.f32.mrf.mxu0
        %v1254 = vadd.f32 0.0, %v1253
        %1255 = vmatmul.f32.gmra.mxu0 %v1207
        %v1256 = vpop.f32.mrf.mxu0
        %v1257 = vadd.f32 0.0, %v1256
        %1258 = vdwg.mxu0
        %v1259 = vadd.f32 %v1181, %v1231
        %v1260 = vadd.f32 %v1182, %v1254
        %v1261 = vadd.f32 %v1183, %v1234
        %v1262 = vadd.f32 %v1184, %v1257
        %1263 = vst [vmem:[#allocation1] ss:$2 sm:$0xff] %v169
        %s1264 = scalar_lea.vmem [#allocation1], 16
        %1265 = vst [vmem:[%s1264] ss:$2 sm:$0xff] %v170
        %v1266 = vld.sshfl [vmem:[#allocation1] sm:$0xff pattern:$0x75316420]
        %v1267 = vld.sshfl [vmem:[#allocation1 + $0x8] sm:$0xff pattern:$0x75316420]
        %v1268 = vld.sshfl [vmem:[#allocation1 + $0x10] sm:$0xff pattern:$0x75316420]
        %1269 = vrot.lane.b32.xlu0 %v1266, 93
        %v1270 = vpop.permute.xlu0 %1269
        %1271 = vrot.lane.b32.xlu0 %v1267, 93
        %v1272 = vpop.permute.xlu0 %1271
        %1273 = vrot.lane.b32.xlu0 %v1268, 93
        %v1274 = vpop.permute.xlu0 %1273
        %vm1275 = vcmask 760832
        %v1276 = vsel %vm1275, %v1270, %v1272
        %v1277 = vsel %vm1275, %v1272, %v1274
        %v1280 = vsel %vm431, %v1276, 0.0
        %v1281 = vsel %vm432, %v1277, 0.0
        %s1282 = scalar_lea.vmem %s1, 208
        %v1283 = vld [vmem:[%s1282] sm:$0xff]
        %v1284 = vld [vmem:[%s1282 + $0x8] sm:$0xff]
        %v1286 = vsel %vm235, %v1283, 0
        %v1289 = vsel %vm235, %v1284, 0
        %v1292 = vsel %vm242, %v1280, 0
        %v1295 = vsel %vm242, %v1281, 0
        %1297 = vmatpush.msra.mxu0 0.0
        %1298 = vmatpush.msra.mxu0 0.0
        %1299 = vmatpush.msra.mxu0 0.0
        %1300 = vmatpush.msra.mxu0 0.0
        %1301 = vmatpush.msra.mxu0 0.0
        %1302 = vmatpush.msra.mxu0 0.0
        %1303 = vmatpush.msra.mxu0 0.0
        %1304 = vmatpush.msra.mxu0 0.0
        %1305 = vmatpush.msra.mxu0 0.0
        %1306 = vmatpush.msra.mxu0 0.0
        %1307 = vmatpush.msra.mxu0 0.0
        %1308 = vmatpush.msra.mxu0 0.0
        %1309 = vmatpush.msra.mxu0 0.0
        %1310 = vmatpush.msra.mxu0 0.0
        %1311 = vmatpush.msra.mxu0 0.0
        %1312 = vmatpush.msra.mxu0 %v1292
        %1313 = vmatmul.f32.gmra.mxu0 %v1286
        %v1314 = vpop.f32.mrf.mxu0
        %v1315 = vadd.f32 0.0, %v1314
        %1316 = vmatmul.f32.gmra.mxu0 %v1289
        %v1317 = vpop.f32.mrf.mxu0
        %v1318 = vadd.f32 0.0, %v1317
        %1319 = vdwg.mxu0
        %1320 = vmatpush.msra.mxu0 0.0
        %1321 = vmatpush.msra.mxu0 0.0
        %1322 = vmatpush.msra.mxu0 0.0
        %1323 = vmatpush.msra.mxu0 0.0
        %1324 = vmatpush.msra.mxu0 0.0
        %1325 = vmatpush.msra.mxu0 0.0
        %1326 = vmatpush.msra.mxu0 0.0
        %1327 = vmatpush.msra.mxu0 0.0
        %1328 = vmatpush.msra.mxu0 0.0
        %1329 = vmatpush.msra.mxu0 0.0
        %1330 = vmatpush.msra.mxu0 0.0
        %1331 = vmatpush.msra.mxu0 0.0
        %1332 = vmatpush.msra.mxu0 0.0
        %1333 = vmatpush.msra.mxu0 0.0
        %1334 = vmatpush.msra.mxu0 0.0
        %1335 = vmatpush.msra.mxu0 %v1295
        %1336 = vmatmul.f32.gmra.mxu0 %v1286
        %v1337 = vpop.f32.mrf.mxu0
        %v1338 = vadd.f32 0.0, %v1337
        %1339 = vmatmul.f32.gmra.mxu0 %v1289
        %v1340 = vpop.f32.mrf.mxu0
        %v1341 = vadd.f32 0.0, %v1340
        %1342 = vdwg.mxu0
        %v1343 = vadd.f32 %v1259, %v1315
        %v1344 = vadd.f32 %v1260, %v1338
        %v1345 = vadd.f32 %v1261, %v1318
        %v1346 = vadd.f32 %v1262, %v1341
        %1347 = vst [vmem:[#allocation1] ss:$2 sm:$0xff] %v169
        %s1348 = scalar_lea.vmem [#allocation1], 16
        %1349 = vst [vmem:[%s1348] ss:$2 sm:$0xff] %v170
        %v1350 = vld.sshfl [vmem:[#allocation1] sm:$0xff pattern:$0x75316420]
        %v1351 = vld.sshfl [vmem:[#allocation1 + $0x8] sm:$0xff pattern:$0x75316420]
        %v1352 = vld.sshfl [vmem:[#allocation1 + $0x10] sm:$0xff pattern:$0x75316420]
        %1353 = vrot.lane.b32.xlu0 %v1350, 92
        %v1354 = vpop.permute.xlu0 %1353
        %1355 = vrot.lane.b32.xlu0 %v1351, 92
        %v1356 = vpop.permute.xlu0 %1355
        %1357 = vrot.lane.b32.xlu0 %v1352, 92
        %v1358 = vpop.permute.xlu0 %1357
        %vm1359 = vcmask 752640
        %v1360 = vsel %vm1359, %v1354, %v1356
        %v1361 = vsel %vm1359, %v1356, %v1358
        %v1364 = vsel %vm517, %v1360, 0.0
        %v1365 = vsel %vm518, %v1361, 0.0
        %s1366 = scalar_lea.vmem %s1, 224
        %v1367 = vld [vmem:[%s1366] sm:$0xff]
        %v1368 = vld [vmem:[%s1366 + $0x8] sm:$0xff]
        %v1370 = vsel %vm235, %v1367, 0
        %v1373 = vsel %vm235, %v1368, 0
        %v1376 = vsel %vm242, %v1364, 0
        %v1379 = vsel %vm242, %v1365, 0
        %1381 = vmatpush.msra.mxu0 0.0
        %1382 = vmatpush.msra.mxu0 0.0
        %1383 = vmatpush.msra.mxu0 0.0
        %1384 = vmatpush.msra.mxu0 0.0
        %1385 = vmatpush.msra.mxu0 0.0
        %1386 = vmatpush.msra.mxu0 0.0
        %1387 = vmatpush.msra.mxu0 0.0
        %1388 = vmatpush.msra.mxu0 0.0
        %1389 = vmatpush.msra.mxu0 0.0
        %1390 = vmatpush.msra.mxu0 0.0
        %1391 = vmatpush.msra.mxu0 0.0
        %1392 = vmatpush.msra.mxu0 0.0
        %1393 = vmatpush.msra.mxu0 0.0
        %1394 = vmatpush.msra.mxu0 0.0
        %1395 = vmatpush.msra.mxu0 0.0
        %1396 = vmatpush.msra.mxu0 %v1376
        %1397 = vmatmul.f32.gmra.mxu0 %v1370
        %v1398 = vpop.f32.mrf.mxu0
        %v1399 = vadd.f32 0.0, %v1398
        %1400 = vmatmul.f32.gmra.mxu0 %v1373
        %v1401 = vpop.f32.mrf.mxu0
        %v1402 = vadd.f32 0.0, %v1401
        %1403 = vdwg.mxu0
        %1404 = vmatpush.msra.mxu0 0.0
        %1405 = vmatpush.msra.mxu0 0.0
        %1406 = vmatpush.msra.mxu0 0.0
        %1407 = vmatpush.msra.mxu0 0.0
        %1408 = vmatpush.msra.mxu0 0.0
        %1409 = vmatpush.msra.mxu0 0.0
        %1410 = vmatpush.msra.mxu0 0.0
        %1411 = vmatpush.msra.mxu0 0.0
        %1412 = vmatpush.msra.mxu0 0.0
        %1413 = vmatpush.msra.mxu0 0.0
        %1414 = vmatpush.msra.mxu0 0.0
        %1415 = vmatpush.msra.mxu0 0.0
        %1416 = vmatpush.msra.mxu0 0.0
        %1417 = vmatpush.msra.mxu0 0.0
        %1418 = vmatpush.msra.mxu0 0.0
        %1419 = vmatpush.msra.mxu0 %v1379
        %1420 = vmatmul.f32.gmra.mxu0 %v1370
        %v1421 = vpop.f32.mrf.mxu0
        %v1422 = vadd.f32 0.0, %v1421
        %1423 = vmatmul.f32.gmra.mxu0 %v1373
        %v1424 = vpop.f32.mrf.mxu0
        %v1425 = vadd.f32 0.0, %v1424
        %1426 = vdwg.mxu0
        %v1427 = vadd.f32 %v1343, %v1399
        %v1428 = vadd.f32 %v1344, %v1422
        %v1429 = vadd.f32 %v1345, %v1402
        %v1430 = vadd.f32 %v1346, %v1425
        %1431 = vst [vmem:[#allocation1] ss:$2 sm:$0xff] %v169
        %s1432 = scalar_lea.vmem [#allocation1], 16
        %1433 = vst [vmem:[%s1432] ss:$2 sm:$0xff] %v170
        %v1434 = vld.sshfl [vmem:[#allocation1] sm:$0xff pattern:$0x75316420]
        %v1435 = vld.sshfl [vmem:[#allocation1 + $0x8] sm:$0xff pattern:$0x75316420]
        %v1436 = vld.sshfl [vmem:[#allocation1 + $0x10] sm:$0xff pattern:$0x75316420]
        %1437 = vrot.lane.b32.xlu0 %v1434, 80
        %v1438 = vpop.permute.xlu0 %1437
        %1439 = vrot.lane.b32.xlu0 %v1435, 80
        %v1440 = vpop.permute.xlu0 %1439
        %1441 = vrot.lane.b32.xlu0 %v1436, 80
        %v1442 = vpop.permute.xlu0 %1441
        %vm1443 = vcmask 654336
        %v1444 = vsel %vm1443, %v1438, %v1440
        %v1445 = vsel %vm1443, %v1440, %v1442
        %v1448 = vsel %vm198, %v1444, 0.0
        %v1449 = vsel %vm199, %v1445, 0.0
        %s1450 = scalar_lea.vmem %s1, 240
        %v1451 = vld [vmem:[%s1450] sm:$0xff]
        %v1452 = vld [vmem:[%s1450 + $0x8] sm:$0xff]
        %v1454 = vsel %vm235, %v1451, 0
        %v1457 = vsel %vm235, %v1452, 0
        %v1460 = vsel %vm242, %v1448, 0
        %v1463 = vsel %vm242, %v1449, 0
        %1465 = vmatpush.msra.mxu0 0.0
        %1466 = vmatpush.msra.mxu0 0.0
        %1467 = vmatpush.msra.mxu0 0.0
        %1468 = vmatpush.msra.mxu0 0.0
        %1469 = vmatpush.msra.mxu0 0.0
        %1470 = vmatpush.msra.mxu0 0.0
        %1471 = vmatpush.msra.mxu0 0.0
        %1472 = vmatpush.msra.mxu0 0.0
        %1473 = vmatpush.msra.mxu0 0.0
        %1474 = vmatpush.msra.mxu0 0.0
        %1475 = vmatpush.msra.mxu0 0.0
        %1476 = vmatpush.msra.mxu0 0.0
        %1477 = vmatpush.msra.mxu0 0.0
        %1478 = vmatpush.msra.mxu0 0.0
        %1479 = vmatpush.msra.mxu0 0.0
        %1480 = vmatpush.msra.mxu0 %v1460
        %1481 = vmatmul.f32.gmra.mxu0 %v1454
        %v1482 = vpop.f32.mrf.mxu0
        %v1483 = vadd.f32 0.0, %v1482
        %1484 = vmatmul.f32.gmra.mxu0 %v1457
        %v1485 = vpop.f32.mrf.mxu0
        %v1486 = vadd.f32 0.0, %v1485
        %1487 = vdwg.mxu0
        %1488 = vmatpush.msra.mxu0 0.0
        %1489 = vmatpush.msra.mxu0 0.0
        %1490 = vmatpush.msra.mxu0 0.0
        %1491 = vmatpush.msra.mxu0 0.0
        %1492 = vmatpush.msra.mxu0 0.0
        %1493 = vmatpush.msra.mxu0 0.0
        %1494 = vmatpush.msra.mxu0 0.0
        %1495 = vmatpush.msra.mxu0 0.0
        %1496 = vmatpush.msra.mxu0 0.0
        %1497 = vmatpush.msra.mxu0 0.0
        %1498 = vmatpush.msra.mxu0 0.0
        %1499 = vmatpush.msra.mxu0 0.0
        %1500 = vmatpush.msra.mxu0 0.0
        %1501 = vmatpush.msra.mxu0 0.0
        %1502 = vmatpush.msra.mxu0 0.0
        %1503 = vmatpush.msra.mxu0 %v1463
        %1504 = vmatmul.f32.gmra.mxu0 %v1454
        %v1505 = vpop.f32.mrf.mxu0
        %v1506 = vadd.f32 0.0, %v1505
        %1507 = vmatmul.f32.gmra.mxu0 %v1457
        %v1508 = vpop.f32.mrf.mxu0
        %v1509 = vadd.f32 0.0, %v1508
        %1510 = vdwg.mxu0
        %v1511 = vadd.f32 %v1427, %v1483
        %v1512 = vadd.f32 %v1428, %v1506
        %v1513 = vadd.f32 %v1429, %v1486
        %v1514 = vadd.f32 %v1430, %v1509
        %1515 = vst [vmem:[#allocation1] ss:$2 sm:$0xff] %v169
        %s1516 = scalar_lea.vmem [#allocation1], 16
        %1517 = vst [vmem:[%s1516] ss:$2 sm:$0xff] %v170
        %v1518 = vld.sshfl [vmem:[#allocation1] sm:$0xff pattern:$0x75316420]
        %v1519 = vld.sshfl [vmem:[#allocation1 + $0x8] sm:$0xff pattern:$0x75316420]
        %v1520 = vld.sshfl [vmem:[#allocation1 + $0x10] sm:$0xff pattern:$0x75316420]
        %1521 = vrot.lane.b32.xlu0 %v1518, 79
        %v1522 = vpop.permute.xlu0 %1521
        %1523 = vrot.lane.b32.xlu0 %v1519, 79
        %v1524 = vpop.permute.xlu0 %1523
        %1525 = vrot.lane.b32.xlu0 %v1520, 79
        %v1526 = vpop.permute.xlu0 %1525
        %vm1527 = vcmask 646144
        %v1528 = vsel %vm1527, %v1522, %v1524
        %v1529 = vsel %vm1527, %v1524, %v1526
        %v1532 = vsel %vm210, %v1528, 0.0
        %v1533 = vsel %vm211, %v1529, 0.0
        %s1534 = scalar_lea.vmem %s1, 256
        %v1535 = vld [vmem:[%s1534] sm:$0xff]
        %v1536 = vld [vmem:[%s1534 + $0x8] sm:$0xff]
        %v1538 = vsel %vm235, %v1535, 0
        %v1541 = vsel %vm235, %v1536, 0
        %v1544 = vsel %vm242, %v1532, 0
        %v1547 = vsel %vm242, %v1533, 0
        %1549 = vmatpush.msra.mxu0 0.0
        %1550 = vmatpush.msra.mxu0 0.0
        %1551 = vmatpush.msra.mxu0 0.0
        %1552 = vmatpush.msra.mxu0 0.0
        %1553 = vmatpush.msra.mxu0 0.0
        %1554 = vmatpush.msra.mxu0 0.0
        %1555 = vmatpush.msra.mxu0 0.0
        %1556 = vmatpush.msra.mxu0 0.0
        %1557 = vmatpush.msra.mxu0 0.0
        %1558 = vmatpush.msra.mxu0 0.0
        %1559 = vmatpush.msra.mxu0 0.0
        %1560 = vmatpush.msra.mxu0 0.0
        %1561 = vmatpush.msra.mxu0 0.0
        %1562 = vmatpush.msra.mxu0 0.0
        %1563 = vmatpush.msra.mxu0 0.0
        %1564 = vmatpush.msra.mxu0 %v1544
        %1565 = vmatmul.f32.gmra.mxu0 %v1538
        %v1566 = vpop.f32.mrf.mxu0
        %v1567 = vadd.f32 0.0, %v1566
        %1568 = vmatmul.f32.gmra.mxu0 %v1541
        %v1569 = vpop.f32.mrf.mxu0
        %v1570 = vadd.f32 0.0, %v1569
        %1571 = vdwg.mxu0
        %1572 = vmatpush.msra.mxu0 0.0
        %1573 = vmatpush.msra.mxu0 0.0
        %1574 = vmatpush.msra.mxu0 0.0
        %1575 = vmatpush.msra.mxu0 0.0
        %1576 = vmatpush.msra.mxu0 0.0
        %1577 = vmatpush.msra.mxu0 0.0
        %1578 = vmatpush.msra.mxu0 0.0
        %1579 = vmatpush.msra.mxu0 0.0
        %1580 = vmatpush.msra.mxu0 0.0
        %1581 = vmatpush.msra.mxu0 0.0
        %1582 = vmatpush.msra.mxu0 0.0
        %1583 = vmatpush.msra.mxu0 0.0
        %1584 = vmatpush.msra.mxu0 0.0
        %1585 = vmatpush.msra.mxu0 0.0
        %1586 = vmatpush.msra.mxu0 0.0
        %1587 = vmatpush.msra.mxu0 %v1547
        %1588 = vmatmul.f32.gmra.mxu0 %v1538
        %v1589 = vpop.f32.mrf.mxu0
        %v1590 = vadd.f32 0.0, %v1589
        %1591 = vmatmul.f32.gmra.mxu0 %v1541
        %v1592 = vpop.f32.mrf.mxu0
        %v1593 = vadd.f32 0.0, %v1592
        %1594 = vdwg.mxu0
        %v1595 = vadd.f32 %v1511, %v1567
        %v1596 = vadd.f32 %v1512, %v1590
        %v1597 = vadd.f32 %v1513, %v1570
        %v1598 = vadd.f32 %v1514, %v1593
        %s1599 = scalar_lea.vmem %s1, 272
        %v1600 = vld [vmem:[%s1599] sm:$0xff]
        %v1601 = vld [vmem:[%s1599 + $0x8] sm:$0xff]
        %1602 = vst [vmem:[#allocation1] ss:$2 sm:$0xff] %v169
        %s1603 = scalar_lea.vmem [#allocation1], 16
        %1604 = vst [vmem:[%s1603] ss:$2 sm:$0xff] %v170
        %v1605 = vld.sshfl [vmem:[#allocation1] sm:$0xff pattern:$0x75316420]
        %v1606 = vld.sshfl [vmem:[#allocation1 + $0x8] sm:$0xff pattern:$0x75316420]
        %v1607 = vld.sshfl [vmem:[#allocation1 + $0x10] sm:$0xff pattern:$0x75316420]
        %1608 = vrot.lane.b32.xlu0 %v1605, 78
        %v1609 = vpop.permute.xlu0 %1608
        %1610 = vrot.lane.b32.xlu0 %v1606, 78
        %v1611 = vpop.permute.xlu0 %1610
        %1612 = vrot.lane.b32.xlu0 %v1607, 78
        %v1613 = vpop.permute.xlu0 %1612
        %vm1614 = vcmask 637952
        %v1615 = vsel %vm1614, %v1609, %v1611
        %v1616 = vsel %vm1614, %v1611, %v1613
        %v1618 = vsel %vm235, %v1600, 0
        %v1621 = vsel %vm235, %v1601, 0
        %v1623 = vsel %vm242, %v1615, 0
        %v1625 = vsel %vm242, %v1616, 0
        %1627 = vmatpush.msra.mxu0 0.0
        %1628 = vmatpush.msra.mxu0 0.0
        %1629 = vmatpush.msra.mxu0 0.0
        %1630 = vmatpush.msra.mxu0 0.0
        %1631 = vmatpush.msra.mxu0 0.0
        %1632 = vmatpush.msra.mxu0 0.0
        %1633 = vmatpush.msra.mxu0 0.0
        %1634 = vmatpush.msra.mxu0 0.0
        %1635 = vmatpush.msra.mxu0 0.0
        %1636 = vmatpush.msra.mxu0 0.0
        %1637 = vmatpush.msra.mxu0 0.0
        %1638 = vmatpush.msra.mxu0 0.0
        %1639 = vmatpush.msra.mxu0 0.0
        %1640 = vmatpush.msra.mxu0 0.0
        %1641 = vmatpush.msra.mxu0 0.0
        %1642 = vmatpush.msra.mxu0 %v1623
        %1643 = vmatmul.f32.gmra.mxu0 %v1618
        %v1644 = vpop.f32.mrf.mxu0
        %v1645 = vadd.f32 0.0, %v1644
        %1646 = vmatmul.f32.gmra.mxu0 %v1621
        %v1647 = vpop.f32.mrf.mxu0
        %v1648 = vadd.f32 0.0, %v1647
        %1649 = vdwg.mxu0
        %1650 = vmatpush.msra.mxu0 0.0
        %1651 = vmatpush.msra.mxu0 0.0
        %1652 = vmatpush.msra.mxu0 0.0
        %1653 = vmatpush.msra.mxu0 0.0
        %1654 = vmatpush.msra.mxu0 0.0
        %1655 = vmatpush.msra.mxu0 0.0
        %1656 = vmatpush.msra.mxu0 0.0
        %1657 = vmatpush.msra.mxu0 0.0
        %1658 = vmatpush.msra.mxu0 0.0
        %1659 = vmatpush.msra.mxu0 0.0
        %1660 = vmatpush.msra.mxu0 0.0
        %1661 = vmatpush.msra.mxu0 0.0
        %1662 = vmatpush.msra.mxu0 0.0
        %1663 = vmatpush.msra.mxu0 0.0
        %1664 = vmatpush.msra.mxu0 0.0
        %1665 = vmatpush.msra.mxu0 %v1625
        %1666 = vmatmul.f32.gmra.mxu0 %v1618
        %v1667 = vpop.f32.mrf.mxu0
        %v1668 = vadd.f32 0.0, %v1667
        %1669 = vmatmul.f32.gmra.mxu0 %v1621
        %v1670 = vpop.f32.mrf.mxu0
        %v1671 = vadd.f32 0.0, %v1670
        %1672 = vdwg.mxu0
        %v1673 = vadd.f32 %v1595, %v1645
        %v1674 = vadd.f32 %v1596, %v1668
        %v1675 = vadd.f32 %v1597, %v1648
        %v1676 = vadd.f32 %v1598, %v1671
        %1677 = vst [vmem:[#allocation1] ss:$2 sm:$0xff] %v169
        %s1678 = scalar_lea.vmem [#allocation1], 16
        %1679 = vst [vmem:[%s1678] ss:$2 sm:$0xff] %v170
        %v1680 = vld.sshfl [vmem:[#allocation1] sm:$0xff pattern:$0x75316420]
        %v1681 = vld.sshfl [vmem:[#allocation1 + $0x8] sm:$0xff pattern:$0x75316420]
        %v1682 = vld.sshfl [vmem:[#allocation1 + $0x10] sm:$0xff pattern:$0x75316420]
        %1683 = vrot.lane.b32.xlu0 %v1680, 77
        %v1684 = vpop.permute.xlu0 %1683
        %1685 = vrot.lane.b32.xlu0 %v1681, 77
        %v1686 = vpop.permute.xlu0 %1685
        %1687 = vrot.lane.b32.xlu0 %v1682, 77
        %v1688 = vpop.permute.xlu0 %1687
        %vm1689 = vcmask 629760
        %v1690 = vsel %vm1689, %v1684, %v1686
        %v1691 = vsel %vm1689, %v1686, %v1688
        %v1694 = vsel %vm431, %v1690, 0.0
        %v1695 = vsel %vm432, %v1691, 0.0
        %s1696 = scalar_lea.vmem %s1, 288
        %v1697 = vld [vmem:[%s1696] sm:$0xff]
        %v1698 = vld [vmem:[%s1696 + $0x8] sm:$0xff]
        %v1700 = vsel %vm235, %v1697, 0
        %v1703 = vsel %vm235, %v1698, 0
        %v1706 = vsel %vm242, %v1694, 0
        %v1709 = vsel %vm242, %v1695, 0
        %1711 = vmatpush.msra.mxu0 0.0
        %1712 = vmatpush.msra.mxu0 0.0
        %1713 = vmatpush.msra.mxu0 0.0
        %1714 = vmatpush.msra.mxu0 0.0
        %1715 = vmatpush.msra.mxu0 0.0
        %1716 = vmatpush.msra.mxu0 0.0
        %1717 = vmatpush.msra.mxu0 0.0
        %1718 = vmatpush.msra.mxu0 0.0
        %1719 = vmatpush.msra.mxu0 0.0
        %1720 = vmatpush.msra.mxu0 0.0
        %1721 = vmatpush.msra.mxu0 0.0
        %1722 = vmatpush.msra.mxu0 0.0
        %1723 = vmatpush.msra.mxu0 0.0
        %1724 = vmatpush.msra.mxu0 0.0
        %1725 = vmatpush.msra.mxu0 0.0
        %1726 = vmatpush.msra.mxu0 %v1706
        %1727 = vmatmul.f32.gmra.mxu0 %v1700
        %v1728 = vpop.f32.mrf.mxu0
        %v1729 = vadd.f32 0.0, %v1728
        %1730 = vmatmul.f32.gmra.mxu0 %v1703
        %v1731 = vpop.f32.mrf.mxu0
        %v1732 = vadd.f32 0.0, %v1731
        %1733 = vdwg.mxu0
        %1734 = vmatpush.msra.mxu0 0.0
        %1735 = vmatpush.msra.mxu0 0.0
        %1736 = vmatpush.msra.mxu0 0.0
        %1737 = vmatpush.msra.mxu0 0.0
        %1738 = vmatpush.msra.mxu0 0.0
        %1739 = vmatpush.msra.mxu0 0.0
        %1740 = vmatpush.msra.mxu0 0.0
        %1741 = vmatpush.msra.mxu0 0.0
        %1742 = vmatpush.msra.mxu0 0.0
        %1743 = vmatpush.msra.mxu0 0.0
        %1744 = vmatpush.msra.mxu0 0.0
        %1745 = vmatpush.msra.mxu0 0.0
        %1746 = vmatpush.msra.mxu0 0.0
        %1747 = vmatpush.msra.mxu0 0.0
        %1748 = vmatpush.msra.mxu0 0.0
        %1749 = vmatpush.msra.mxu0 %v1709
        %1750 = vmatmul.f32.gmra.mxu0 %v1700
        %v1751 = vpop.f32.mrf.mxu0
        %v1752 = vadd.f32 0.0, %v1751
        %1753 = vmatmul.f32.gmra.mxu0 %v1703
        %v1754 = vpop.f32.mrf.mxu0
        %v1755 = vadd.f32 0.0, %v1754
        %1756 = vdwg.mxu0
        %v1757 = vadd.f32 %v1673, %v1729
        %v1758 = vadd.f32 %v1674, %v1752
        %v1759 = vadd.f32 %v1675, %v1732
        %v1760 = vadd.f32 %v1676, %v1755
        %1761 = vst [vmem:[#allocation1] ss:$2 sm:$0xff] %v169
        %s1762 = scalar_lea.vmem [#allocation1], 16
        %1763 = vst [vmem:[%s1762] ss:$2 sm:$0xff] %v170
        %v1764 = vld.sshfl [vmem:[#allocation1] sm:$0xff pattern:$0x75316420]
        %v1765 = vld.sshfl [vmem:[#allocation1 + $0x8] sm:$0xff pattern:$0x75316420]
        %v1766 = vld.sshfl [vmem:[#allocation1 + $0x10] sm:$0xff pattern:$0x75316420]
        %1767 = vrot.lane.b32.xlu0 %v1764, 76
        %v1768 = vpop.permute.xlu0 %1767
        %1769 = vrot.lane.b32.xlu0 %v1765, 76
        %v1770 = vpop.permute.xlu0 %1769
        %1771 = vrot.lane.b32.xlu0 %v1766, 76
        %v1772 = vpop.permute.xlu0 %1771
        %vm1773 = vcmask 621568
        %v1774 = vsel %vm1773, %v1768, %v1770
        %v1775 = vsel %vm1773, %v1770, %v1772
        %v1778 = vsel %vm517, %v1774, 0.0
        %v1779 = vsel %vm518, %v1775, 0.0
        %s1780 = scalar_lea.vmem %s1, 304
        %v1781 = vld [vmem:[%s1780] sm:$0xff]
        %v1782 = vld [vmem:[%s1780 + $0x8] sm:$0xff]
        %v1784 = vsel %vm235, %v1781, 0
        %v1787 = vsel %vm235, %v1782, 0
        %v1790 = vsel %vm242, %v1778, 0
        %v1793 = vsel %vm242, %v1779, 0
        %1795 = vmatpush.msra.mxu0 0.0
        %1796 = vmatpush.msra.mxu0 0.0
        %1797 = vmatpush.msra.mxu0 0.0
        %1798 = vmatpush.msra.mxu0 0.0
        %1799 = vmatpush.msra.mxu0 0.0
        %1800 = vmatpush.msra.mxu0 0.0
        %1801 = vmatpush.msra.mxu0 0.0
        %1802 = vmatpush.msra.mxu0 0.0
        %1803 = vmatpush.msra.mxu0 0.0
        %1804 = vmatpush.msra.mxu0 0.0
        %1805 = vmatpush.msra.mxu0 0.0
        %1806 = vmatpush.msra.mxu0 0.0
        %1807 = vmatpush.msra.mxu0 0.0
        %1808 = vmatpush.msra.mxu0 0.0
        %1809 = vmatpush.msra.mxu0 0.0
        %1810 = vmatpush.msra.mxu0 %v1790
        %1811 = vmatmul.f32.gmra.mxu0 %v1784
        %v1812 = vpop.f32.mrf.mxu0
        %v1813 = vadd.f32 0.0, %v1812
        %1814 = vmatmul.f32.gmra.mxu0 %v1787
        %v1815 = vpop.f32.mrf.mxu0
        %v1816 = vadd.f32 0.0, %v1815
        %1817 = vdwg.mxu0
        %1818 = vmatpush.msra.mxu0 0.0
        %1819 = vmatpush.msra.mxu0 0.0
        %1820 = vmatpush.msra.mxu0 0.0
        %1821 = vmatpush.msra.mxu0 0.0
        %1822 = vmatpush.msra.mxu0 0.0
        %1823 = vmatpush.msra.mxu0 0.0
        %1824 = vmatpush.msra.mxu0 0.0
        %1825 = vmatpush.msra.mxu0 0.0
        %1826 = vmatpush.msra.mxu0 0.0
        %1827 = vmatpush.msra.mxu0 0.0
        %1828 = vmatpush.msra.mxu0 0.0
        %1829 = vmatpush.msra.mxu0 0.0
        %1830 = vmatpush.msra.mxu0 0.0
        %1831 = vmatpush.msra.mxu0 0.0
        %1832 = vmatpush.msra.mxu0 0.0
        %1833 = vmatpush.msra.mxu0 %v1793
        %1834 = vmatmul.f32.gmra.mxu0 %v1784
        %v1835 = vpop.f32.mrf.mxu0
        %v1836 = vadd.f32 0.0, %v1835
        %1837 = vmatmul.f32.gmra.mxu0 %v1787
        %v1838 = vpop.f32.mrf.mxu0
        %v1839 = vadd.f32 0.0, %v1838
        %1840 = vdwg.mxu0
        %v1841 = vadd.f32 %v1757, %v1813
        %v1842 = vadd.f32 %v1758, %v1836
        %v1843 = vadd.f32 %v1759, %v1816
        %v1844 = vadd.f32 %v1760, %v1839
        %1845 = vst [vmem:[#allocation1] ss:$2 sm:$0xff] %v169
        %s1846 = scalar_lea.vmem [#allocation1], 16
        %1847 = vst [vmem:[%s1846] ss:$2 sm:$0xff] %v170
        %v1848 = vld.sshfl [vmem:[#allocation1] sm:$0xff pattern:$0x75316420]
        %v1849 = vld.sshfl [vmem:[#allocation1 + $0x8] sm:$0xff pattern:$0x75316420]
        %v1850 = vld.sshfl [vmem:[#allocation1 + $0x10] sm:$0xff pattern:$0x75316420]
        %1851 = vrot.lane.b32.xlu0 %v1848, 64
        %v1852 = vpop.permute.xlu0 %1851
        %1853 = vrot.lane.b32.xlu0 %v1849, 64
        %v1854 = vpop.permute.xlu0 %1853
        %1855 = vrot.lane.b32.xlu0 %v1850, 64
        %v1856 = vpop.permute.xlu0 %1855
        %vm1857 = vcmask 523264
        %v1858 = vsel %vm1857, %v1852, %v1854
        %v1859 = vsel %vm1857, %v1854, %v1856
        %v1862 = vsel %vm198, %v1858, 0.0
        %v1863 = vsel %vm199, %v1859, 0.0
        %s1864 = scalar_lea.vmem %s1, 320
        %v1865 = vld [vmem:[%s1864] sm:$0xff]
        %v1866 = vld [vmem:[%s1864 + $0x8] sm:$0xff]
        %v1868 = vsel %vm235, %v1865, 0
        %v1871 = vsel %vm235, %v1866, 0
        %v1874 = vsel %vm242, %v1862, 0
        %v1877 = vsel %vm242, %v1863, 0
        %1879 = vmatpush.msra.mxu0 0.0
        %1880 = vmatpush.msra.mxu0 0.0
        %1881 = vmatpush.msra.mxu0 0.0
        %1882 = vmatpush.msra.mxu0 0.0
        %1883 = vmatpush.msra.mxu0 0.0
        %1884 = vmatpush.msra.mxu0 0.0
        %1885 = vmatpush.msra.mxu0 0.0
        %1886 = vmatpush.msra.mxu0 0.0
        %1887 = vmatpush.msra.mxu0 0.0
        %1888 = vmatpush.msra.mxu0 0.0
        %1889 = vmatpush.msra.mxu0 0.0
        %1890 = vmatpush.msra.mxu0 0.0
        %1891 = vmatpush.msra.mxu0 0.0
        %1892 = vmatpush.msra.mxu0 0.0
        %1893 = vmatpush.msra.mxu0 0.0
        %1894 = vmatpush.msra.mxu0 %v1874
        %1895 = vmatmul.f32.gmra.mxu0 %v1868
        %v1896 = vpop.f32.mrf.mxu0
        %v1897 = vadd.f32 0.0, %v1896
        %1898 = vmatmul.f32.gmra.mxu0 %v1871
        %v1899 = vpop.f32.mrf.mxu0
        %v1900 = vadd.f32 0.0, %v1899
        %1901 = vdwg.mxu0
        %1902 = vmatpush.msra.mxu0 0.0
        %1903 = vmatpush.msra.mxu0 0.0
        %1904 = vmatpush.msra.mxu0 0.0
        %1905 = vmatpush.msra.mxu0 0.0
        %1906 = vmatpush.msra.mxu0 0.0
        %1907 = vmatpush.msra.mxu0 0.0
        %1908 = vmatpush.msra.mxu0 0.0
        %1909 = vmatpush.msra.mxu0 0.0
        %1910 = vmatpush.msra.mxu0 0.0
        %1911 = vmatpush.msra.mxu0 0.0
        %1912 = vmatpush.msra.mxu0 0.0
        %1913 = vmatpush.msra.mxu0 0.0
        %1914 = vmatpush.msra.mxu0 0.0
        %1915 = vmatpush.msra.mxu0 0.0
        %1916 = vmatpush.msra.mxu0 0.0
        %1917 = vmatpush.msra.mxu0 %v1877
        %1918 = vmatmul.f32.gmra.mxu0 %v1868
        %v1919 = vpop.f32.mrf.mxu0
        %v1920 = vadd.f32 0.0, %v1919
        %1921 = vmatmul.f32.gmra.mxu0 %v1871
        %v1922 = vpop.f32.mrf.mxu0
        %v1923 = vadd.f32 0.0, %v1922
        %1924 = vdwg.mxu0
        %v1925 = vadd.f32 %v1841, %v1897
        %v1926 = vadd.f32 %v1842, %v1920
        %v1927 = vadd.f32 %v1843, %v1900
        %v1928 = vadd.f32 %v1844, %v1923
        %1929 = vst [vmem:[#allocation1] ss:$2 sm:$0xff] %v169
        %s1930 = scalar_lea.vmem [#allocation1], 16
        %1931 = vst [vmem:[%s1930] ss:$2 sm:$0xff] %v170
        %v1932 = vld.sshfl [vmem:[#allocation1] sm:$0xff pattern:$0x75316420]
        %v1933 = vld.sshfl [vmem:[#allocation1 + $0x8] sm:$0xff pattern:$0x75316420]
        %v1934 = vld.sshfl [vmem:[#allocation1 + $0x10] sm:$0xff pattern:$0x75316420]
        %1935 = vrot.lane.b32.xlu0 %v1932, 63
        %v1936 = vpop.permute.xlu0 %1935
        %1937 = vrot.lane.b32.xlu0 %v1933, 63
        %v1938 = vpop.permute.xlu0 %1937
        %1939 = vrot.lane.b32.xlu0 %v1934, 63
        %v1940 = vpop.permute.xlu0 %1939
        %vm1941 = vcmask 515072
        %v1942 = vsel %vm1941, %v1936, %v1938
        %v1943 = vsel %vm1941, %v1938, %v1940
        %v1946 = vsel %vm210, %v1942, 0.0
        %v1947 = vsel %vm211, %v1943, 0.0
        %s1948 = scalar_lea.vmem %s1, 336
        %v1949 = vld [vmem:[%s1948] sm:$0xff]
        %v1950 = vld [vmem:[%s1948 + $0x8] sm:$0xff]
        %v1952 = vsel %vm235, %v1949, 0
        %v1955 = vsel %vm235, %v1950, 0
        %v1958 = vsel %vm242, %v1946, 0
        %v1961 = vsel %vm242, %v1947, 0
        %1963 = vmatpush.msra.mxu0 0.0
        %1964 = vmatpush.msra.mxu0 0.0
        %1965 = vmatpush.msra.mxu0 0.0
        %1966 = vmatpush.msra.mxu0 0.0
        %1967 = vmatpush.msra.mxu0 0.0
        %1968 = vmatpush.msra.mxu0 0.0
        %1969 = vmatpush.msra.mxu0 0.0
        %1970 = vmatpush.msra.mxu0 0.0
        %1971 = vmatpush.msra.mxu0 0.0
        %1972 = vmatpush.msra.mxu0 0.0
        %1973 = vmatpush.msra.mxu0 0.0
        %1974 = vmatpush.msra.mxu0 0.0
        %1975 = vmatpush.msra.mxu0 0.0
        %1976 = vmatpush.msra.mxu0 0.0
        %1977 = vmatpush.msra.mxu0 0.0
        %1978 = vmatpush.msra.mxu0 %v1958
        %1979 = vmatmul.f32.gmra.mxu0 %v1952
        %v1980 = vpop.f32.mrf.mxu0
        %v1981 = vadd.f32 0.0, %v1980
        %1982 = vmatmul.f32.gmra.mxu0 %v1955
        %v1983 = vpop.f32.mrf.mxu0
        %v1984 = vadd.f32 0.0, %v1983
        %1985 = vdwg.mxu0
        %1986 = vmatpush.msra.mxu0 0.0
        %1987 = vmatpush.msra.mxu0 0.0
        %1988 = vmatpush.msra.mxu0 0.0
        %1989 = vmatpush.msra.mxu0 0.0
        %1990 = vmatpush.msra.mxu0 0.0
        %1991 = vmatpush.msra.mxu0 0.0
        %1992 = vmatpush.msra.mxu0 0.0
        %1993 = vmatpush.msra.mxu0 0.0
        %1994 = vmatpush.msra.mxu0 0.0
        %1995 = vmatpush.msra.mxu0 0.0
        %1996 = vmatpush.msra.mxu0 0.0
        %1997 = vmatpush.msra.mxu0 0.0
        %1998 = vmatpush.msra.mxu0 0.0
        %1999 = vmatpush.msra.mxu0 0.0
        %2000 = vmatpush.msra.mxu0 0.0
        %2001 = vmatpush.msra.mxu0 %v1961
        %2002 = vmatmul.f32.gmra.mxu0 %v1952
        %v2003 = vpop.f32.mrf.mxu0
        %v2004 = vadd.f32 0.0, %v2003
        %2005 = vmatmul.f32.gmra.mxu0 %v1955
        %v2006 = vpop.f32.mrf.mxu0
        %v2007 = vadd.f32 0.0, %v2006
        %2008 = vdwg.mxu0
        %v2009 = vadd.f32 %v1925, %v1981
        %v2010 = vadd.f32 %v1926, %v2004
        %v2011 = vadd.f32 %v1927, %v1984
        %v2012 = vadd.f32 %v1928, %v2007
        %s2013 = scalar_lea.vmem %s1, 352
        %v2014 = vld [vmem:[%s2013] sm:$0xff]
        %v2015 = vld [vmem:[%s2013 + $0x8] sm:$0xff]
        %2016 = vst [vmem:[#allocation1] ss:$2 sm:$0xff] %v169
        %s2017 = scalar_lea.vmem [#allocation1], 16
        %2018 = vst [vmem:[%s2017] ss:$2 sm:$0xff] %v170
        %v2019 = vld.sshfl [vmem:[#allocation1] sm:$0xff pattern:$0x75316420]
        %v2020 = vld.sshfl [vmem:[#allocation1 + $0x8] sm:$0xff pattern:$0x75316420]
        %v2021 = vld.sshfl [vmem:[#allocation1 + $0x10] sm:$0xff pattern:$0x75316420]
        %2022 = vrot.lane.b32.xlu0 %v2019, 62
        %v2023 = vpop.permute.xlu0 %2022
        %2024 = vrot.lane.b32.xlu0 %v2020, 62
        %v2025 = vpop.permute.xlu0 %2024
        %2026 = vrot.lane.b32.xlu0 %v2021, 62
        %v2027 = vpop.permute.xlu0 %2026
        %vm2028 = vcmask 506880
        %v2029 = vsel %vm2028, %v2023, %v2025
        %v2030 = vsel %vm2028, %v2025, %v2027
        %v2032 = vsel %vm235, %v2014, 0
        %v2035 = vsel %vm235, %v2015, 0
        %v2037 = vsel %vm242, %v2029, 0
        %v2039 = vsel %vm242, %v2030, 0
        %2041 = vmatpush.msra.mxu0 0.0
        %2042 = vmatpush.msra.mxu0 0.0
        %2043 = vmatpush.msra.mxu0 0.0
        %2044 = vmatpush.msra.mxu0 0.0
        %2045 = vmatpush.msra.mxu0 0.0
        %2046 = vmatpush.msra.mxu0 0.0
        %2047 = vmatpush.msra.mxu0 0.0
        %2048 = vmatpush.msra.mxu0 0.0
        %2049 = vmatpush.msra.mxu0 0.0
        %2050 = vmatpush.msra.mxu0 0.0
        %2051 = vmatpush.msra.mxu0 0.0
        %2052 = vmatpush.msra.mxu0 0.0
        %2053 = vmatpush.msra.mxu0 0.0
        %2054 = vmatpush.msra.mxu0 0.0
        %2055 = vmatpush.msra.mxu0 0.0
        %2056 = vmatpush.msra.mxu0 %v2037
        %2057 = vmatmul.f32.gmra.mxu0 %v2032
        %v2058 = vpop.f32.mrf.mxu0
        %v2059 = vadd.f32 0.0, %v2058
        %2060 = vmatmul.f32.gmra.mxu0 %v2035
        %v2061 = vpop.f32.mrf.mxu0
        %v2062 = vadd.f32 0.0, %v2061
        %2063 = vdwg.mxu0
        %2064 = vmatpush.msra.mxu0 0.0
        %2065 = vmatpush.msra.mxu0 0.0
        %2066 = vmatpush.msra.mxu0 0.0
        %2067 = vmatpush.msra.mxu0 0.0
        %2068 = vmatpush.msra.mxu0 0.0
        %2069 = vmatpush.msra.mxu0 0.0
        %2070 = vmatpush.msra.mxu0 0.0
        %2071 = vmatpush.msra.mxu0 0.0
        %2072 = vmatpush.msra.mxu0 0.0
        %2073 = vmatpush.msra.mxu0 0.0
        %2074 = vmatpush.msra.mxu0 0.0
        %2075 = vmatpush.msra.mxu0 0.0
        %2076 = vmatpush.msra.mxu0 0.0
        %2077 = vmatpush.msra.mxu0 0.0
        %2078 = vmatpush.msra.mxu0 0.0
        %2079 = vmatpush.msra.mxu0 %v2039
        %2080 = vmatmul.f32.gmra.mxu0 %v2032
        %v2081 = vpop.f32.mrf.mxu0
        %v2082 = vadd.f32 0.0, %v2081
        %2083 = vmatmul.f32.gmra.mxu0 %v2035
        %v2084 = vpop.f32.mrf.mxu0
        %v2085 = vadd.f32 0.0, %v2084
        %2086 = vdwg.mxu0
        %v2087 = vadd.f32 %v2009, %v2059
        %v2088 = vadd.f32 %v2010, %v2082
        %v2089 = vadd.f32 %v2011, %v2062
        %v2090 = vadd.f32 %v2012, %v2085
        %2091 = vst [vmem:[#allocation1] ss:$2 sm:$0xff] %v169
        %s2092 = scalar_lea.vmem [#allocation1], 16
        %2093 = vst [vmem:[%s2092] ss:$2 sm:$0xff] %v170
        %v2094 = vld.sshfl [vmem:[#allocation1] sm:$0xff pattern:$0x75316420]
        %v2095 = vld.sshfl [vmem:[#allocation1 + $0x8] sm:$0xff pattern:$0x75316420]
        %v2096 = vld.sshfl [vmem:[#allocation1 + $0x10] sm:$0xff pattern:$0x75316420]
        %2097 = vrot.lane.b32.xlu0 %v2094, 61
        %v2098 = vpop.permute.xlu0 %2097
        %2099 = vrot.lane.b32.xlu0 %v2095, 61
        %v2100 = vpop.permute.xlu0 %2099
        %2101 = vrot.lane.b32.xlu0 %v2096, 61
        %v2102 = vpop.permute.xlu0 %2101
        %vm2103 = vcmask 498688
        %v2104 = vsel %vm2103, %v2098, %v2100
        %v2105 = vsel %vm2103, %v2100, %v2102
        %v2108 = vsel %vm431, %v2104, 0.0
        %v2109 = vsel %vm432, %v2105, 0.0
        %s2110 = scalar_lea.vmem %s1, 368
        %v2111 = vld [vmem:[%s2110] sm:$0xff]
        %v2112 = vld [vmem:[%s2110 + $0x8] sm:$0xff]
        %v2114 = vsel %vm235, %v2111, 0
        %v2117 = vsel %vm235, %v2112, 0
        %v2120 = vsel %vm242, %v2108, 0
        %v2123 = vsel %vm242, %v2109, 0
        %2125 = vmatpush.msra.mxu0 0.0
        %2126 = vmatpush.msra.mxu0 0.0
        %2127 = vmatpush.msra.mxu0 0.0
        %2128 = vmatpush.msra.mxu0 0.0
        %2129 = vmatpush.msra.mxu0 0.0
        %2130 = vmatpush.msra.mxu0 0.0
        %2131 = vmatpush.msra.mxu0 0.0
        %2132 = vmatpush.msra.mxu0 0.0
        %2133 = vmatpush.msra.mxu0 0.0
        %2134 = vmatpush.msra.mxu0 0.0
        %2135 = vmatpush.msra.mxu0 0.0
        %2136 = vmatpush.msra.mxu0 0.0
        %2137 = vmatpush.msra.mxu0 0.0
        %2138 = vmatpush.msra.mxu0 0.0
        %2139 = vmatpush.msra.mxu0 0.0
        %2140 = vmatpush.msra.mxu0 %v2120
        %2141 = vmatmul.f32.gmra.mxu0 %v2114
        %v2142 = vpop.f32.mrf.mxu0
        %v2143 = vadd.f32 0.0, %v2142
        %2144 = vmatmul.f32.gmra.mxu0 %v2117
        %v2145 = vpop.f32.mrf.mxu0
        %v2146 = vadd.f32 0.0, %v2145
        %2147 = vdwg.mxu0
        %2148 = vmatpush.msra.mxu0 0.0
        %2149 = vmatpush.msra.mxu0 0.0
        %2150 = vmatpush.msra.mxu0 0.0
        %2151 = vmatpush.msra.mxu0 0.0
        %2152 = vmatpush.msra.mxu0 0.0
        %2153 = vmatpush.msra.mxu0 0.0
        %2154 = vmatpush.msra.mxu0 0.0
        %2155 = vmatpush.msra.mxu0 0.0
        %2156 = vmatpush.msra.mxu0 0.0
        %2157 = vmatpush.msra.mxu0 0.0
        %2158 = vmatpush.msra.mxu0 0.0
        %2159 = vmatpush.msra.mxu0 0.0
        %2160 = vmatpush.msra.mxu0 0.0
        %2161 = vmatpush.msra.mxu0 0.0
        %2162 = vmatpush.msra.mxu0 0.0
        %2163 = vmatpush.msra.mxu0 %v2123
        %2164 = vmatmul.f32.gmra.mxu0 %v2114
        %v2165 = vpop.f32.mrf.mxu0
        %v2166 = vadd.f32 0.0, %v2165
        %2167 = vmatmul.f32.gmra.mxu0 %v2117
        %v2168 = vpop.f32.mrf.mxu0
        %v2169 = vadd.f32 0.0, %v2168
        %2170 = vdwg.mxu0
        %v2171 = vadd.f32 %v2087, %v2143
        %v2172 = vadd.f32 %v2088, %v2166
        %v2173 = vadd.f32 %v2089, %v2146
        %v2174 = vadd.f32 %v2090, %v2169
        %2175 = vst [vmem:[#allocation1] ss:$2 sm:$0xff] %v169
        %s2176 = scalar_lea.vmem [#allocation1], 16
        %2177 = vst [vmem:[%s2176] ss:$2 sm:$0xff] %v170
        %v2178 = vld.sshfl [vmem:[#allocation1] sm:$0xff pattern:$0x75316420]
        %v2179 = vld.sshfl [vmem:[#allocation1 + $0x8] sm:$0xff pattern:$0x75316420]
        %v2180 = vld.sshfl [vmem:[#allocation1 + $0x10] sm:$0xff pattern:$0x75316420]
        %2181 = vrot.lane.b32.xlu0 %v2178, 60
        %v2182 = vpop.permute.xlu0 %2181
        %2183 = vrot.lane.b32.xlu0 %v2179, 60
        %v2184 = vpop.permute.xlu0 %2183
        %2185 = vrot.lane.b32.xlu0 %v2180, 60
        %v2186 = vpop.permute.xlu0 %2185
        %vm2187 = vcmask 490496
        %v2188 = vsel %vm2187, %v2182, %v2184
        %v2189 = vsel %vm2187, %v2184, %v2186
        %v2192 = vsel %vm517, %v2188, 0.0
        %v2193 = vsel %vm518, %v2189, 0.0
        %s2194 = scalar_lea.vmem %s1, 384
        %v2195 = vld [vmem:[%s2194] sm:$0xff]
        %v2196 = vld [vmem:[%s2194 + $0x8] sm:$0xff]
        %v2198 = vsel %vm235, %v2195, 0
        %v2201 = vsel %vm235, %v2196, 0
        %v2204 = vsel %vm242, %v2192, 0
        %v2207 = vsel %vm242, %v2193, 0
        %2209 = vmatpush.msra.mxu0 0.0
        %2210 = vmatpush.msra.mxu0 0.0
        %2211 = vmatpush.msra.mxu0 0.0
        %2212 = vmatpush.msra.mxu0 0.0
        %2213 = vmatpush.msra.mxu0 0.0
        %2214 = vmatpush.msra.mxu0 0.0
        %2215 = vmatpush.msra.mxu0 0.0
        %2216 = vmatpush.msra.mxu0 0.0
        %2217 = vmatpush.msra.mxu0 0.0
        %2218 = vmatpush.msra.mxu0 0.0
        %2219 = vmatpush.msra.mxu0 0.0
        %2220 = vmatpush.msra.mxu0 0.0
        %2221 = vmatpush.msra.mxu0 0.0
        %2222 = vmatpush.msra.mxu0 0.0
        %2223 = vmatpush.msra.mxu0 0.0
        %2224 = vmatpush.msra.mxu0 %v2204
        %2225 = vmatmul.f32.gmra.mxu0 %v2198
        %v2226 = vpop.f32.mrf.mxu0
        %v2227 = vadd.f32 0.0, %v2226
        %2228 = vmatmul.f32.gmra.mxu0 %v2201
        %v2229 = vpop.f32.mrf.mxu0
        %v2230 = vadd.f32 0.0, %v2229
        %2231 = vdwg.mxu0
        %2232 = vmatpush.msra.mxu0 0.0
        %2233 = vmatpush.msra.mxu0 0.0
        %2234 = vmatpush.msra.mxu0 0.0
        %2235 = vmatpush.msra.mxu0 0.0
        %2236 = vmatpush.msra.mxu0 0.0
        %2237 = vmatpush.msra.mxu0 0.0
        %2238 = vmatpush.msra.mxu0 0.0
        %2239 = vmatpush.msra.mxu0 0.0
        %2240 = vmatpush.msra.mxu0 0.0
        %2241 = vmatpush.msra.mxu0 0.0
        %2242 = vmatpush.msra.mxu0 0.0
        %2243 = vmatpush.msra.mxu0 0.0
        %2244 = vmatpush.msra.mxu0 0.0
        %2245 = vmatpush.msra.mxu0 0.0
        %2246 = vmatpush.msra.mxu0 0.0
        %2247 = vmatpush.msra.mxu0 %v2207
        %2248 = vmatmul.f32.gmra.mxu0 %v2198
        %v2249 = vpop.f32.mrf.mxu0
        %v2250 = vadd.f32 0.0, %v2249
        %2251 = vmatmul.f32.gmra.mxu0 %v2201
        %v2252 = vpop.f32.mrf.mxu0
        %v2253 = vadd.f32 0.0, %v2252
        %2254 = vdwg.mxu0
        %v2255 = vadd.f32 %v2171, %v2227
        %v2256 = vadd.f32 %v2172, %v2250
        %v2257 = vadd.f32 %v2173, %v2230
        %v2258 = vadd.f32 %v2174, %v2253
        %v2259 = vld [vmem:[%s2] sm:$0xff]
        %v2260 = vld [vmem:[%s2 + $0x8] sm:$0xff]
        %2262 = vset.pattern.permute.xlu0 0
        %2263 = vperm.xlu0 %2262, %v2259
        %v2264 = vpop.permute.xlu0 %2263
        %2267 = vset.pattern.permute.xlu0 0
        %2268 = vperm.xlu0 %2267, %v2260
        %v2269 = vpop.permute.xlu0 %2268
        %v2271 = vadd.f32 %v2255, %v2264
        %v2272 = vadd.f32 %v2256, %v2264
        %v2273 = vadd.f32 %v2257, %v2269
        %v2274 = vadd.f32 %v2258, %v2269
        %v2275 = vmax.f32 %v2271, 0.0
        %v2276 = vmax.f32 %v2272, 0.0
        %v2277 = vmax.f32 %v2273, 0.0
        %v2278 = vmax.f32 %v2274, 0.0
        %2279 = vst [vmem:[%s163] sm:$0xff] %v2275
        %2280 = vst [vmem:[%s163 + $0x8] sm:$0xff] %v2276
        %2281 = vst [vmem:[%s163 + $0x10] sm:$0xff] %v2277
        %2282 = vst [vmem:[%s163 + $0x18] sm:$0xff] %v2278
        %s2283 = sand.u32 %s93, 1
        %s2284 = scalar_lea.sflag [#allocation3], %s2283
        %s2285 = sand.u32 %s93, 1
        %s2286 = smul.addr %s2285, 32
        %s2287 = scalar_lea.vmem [#allocation2], %s2286
        // Predicated region
        $region33: #{tpu_custom_call.1} parent=31 // pred_check
          %p2288 = pneg %p103
        $region34: #{tpu_custom_call.1} parent=31 // pred_check_branch
          %2290 = sbr.rel (%p2288) target = $region36
        $region35: #{tpu_custom_call.1} parent=31 // pred_region
          %2292 = vsyncadd %s2284, 0
          %s2293 = smul.addr %s17, 4
          %s2294 = smul.addr %s2293, 8
          %s2295 = scalar_lea.hbm %s3, %s2294
          %s2296 = sshll.u32 %s2287, 4
          %s2297 = int_to_ptr.vmem [resolvable:$true] %s2296
          %s2298 = sshll.u32 %s2295, 4
          %s2299 = int_to_ptr.hbm [resolvable:$true] %s2298
          %2304 = dma.vmem_to_hbm [thread:$0]  %s2297, 512, %s2299, %s2284, 256, 256, 16
        $region36: #{tpu_custom_call.1} parent=31 // pred_fallthru
          _
      $region32: #{tpu_custom_call.1} parent=5 // pred_fallthru
        _
      %p2305 = scmp.le.s32.totalorder 2, %s12
      // Predicated region
      $region37: #{tpu_custom_call.1} parent=5 // pred_check
        %p2306 = pneg %p2305
      $region38: #{tpu_custom_call.1} parent=5 // pred_check_branch
        %2308 = sbr.rel (%p2306) target = $region40
      $region39: #{tpu_custom_call.1} parent=5 // pred_region
        %s2309 = ssub.s32 %s12, 2
        // Predicated region
        $region41: #{tpu_custom_call.1} parent=39 // pred_check
          %p2310 = pneg %p109
        $region42: #{tpu_custom_call.1} parent=39 // pred_check_branch
          %2312 = sbr.rel (%p2310) target = $region44
        $region43: #{tpu_custom_call.1} parent=39 // pred_region
          %s2313 = sand.u32 %s94, 1
          %s2314 = scalar_lea.sflag [#allocation3], %s2313
          %s2315 = sand.u32 %s94, 1
          %s2316 = smul.addr %s2315, 32
          %s2317 = scalar_lea.vmem [#allocation2], %s2316
          %2319 = dma.done %s2314, 512
        $region44: #{tpu_custom_call.1} parent=39 // pred_fallthru
          _
      $region40: #{tpu_custom_call.1} parent=5 // pred_fallthru
        _
    $region6: #{tpu_custom_call.1} parent=1 // loop_footer
      %s16 = sadd.s32 1, %s12
    $region7: #{tpu_custom_call.1} parent=1 // loop_footer_branch
      %11 = sbr.rel target = $region3
    $region8: #{tpu_custom_call.1} parent=1 // loop_exit
      _
    %2320 = vsyncpa [#allocation3], 1
    %s2321 = scalar_lea.sflag [#allocation3], 1
    %2322 = vsyncpa %s2321, 1

</llo_original>
